<compile_context>
chip_gen: v5e
topology: v5e:2x2
jax: 0.10.0
libtpu: 0.0.40
codegen_flags: <defaults>
</compile_context>

<pallas_src>
import math

import jax
import jax.numpy as jnp
from jax.experimental import pallas as pl
from jax.experimental.pallas import tpu as pltpu

DIM = 512
HEADS = 8
DIM_HEAD = DIM // HEADS          # 64
HD2 = 2 * DIM_HEAD               # 128: two heads packed into one lane tile
NUM_LANDMARKS = DIM // 2         # 256
PINV_ITERS = 6
RES_CONV_K = 33                  # nystrom_attention default residual conv kernel


def _default_vmem_limit():
    cap = 64 * 1024 * 1024
    try:
        info = pltpu.get_tpu_info()
        cap = int(getattr(info, "vmem_capacity_bytes", cap) or cap)
    except Exception:
        pass
    # ~75% of physical per-core VMEM, capped at 96 MiB
    # (=> 96 MiB on v5e/v6e (128 MiB), 48 MiB on v7x (64 MiB)).
    return int(min(96 * 1024 * 1024, cap * 3 // 4))


VMEM_LIMIT = _default_vmem_limit()


def _cparams(*sem):
    return pltpu.CompilerParams(
        dimension_semantics=tuple(sem) if sem else None,
        vmem_limit_bytes=VMEM_LIMIT)


# --------------------------------------------------------------------------
# Linear (bf16 MXU matmul + f32 bias, optional ReLU), row-tiled
# --------------------------------------------------------------------------
def _linear_kernel(x_ref, w_ref, b_ref, o_ref):
    o_ref[...] = (
        jnp.dot(x_ref[...].astype(jnp.bfloat16), w_ref[...],
                preferred_element_type=jnp.float32) + b_ref[...])


def _linear_relu_kernel(x_ref, w_ref, b_ref, o_ref):
    y = (jnp.dot(x_ref[...].astype(jnp.bfloat16), w_ref[...],
                 preferred_element_type=jnp.float32) + b_ref[...])
    o_ref[...] = jnp.maximum(y, 0.0)


def linear(x, w_kn, b=None, relu=False, tile_m=1024):
    """x: (M, K) f32/bf16; w_kn: (K, N) pre-transposed bf16; b: (N,) or None."""
    M, K = x.shape
    N = w_kn.shape[1]
    TM = min(tile_m, M)
    if b is None:
        b = jnp.zeros((N,), jnp.float32)
    kern = _linear_relu_kernel if relu else _linear_kernel
    return pl.pallas_call(
        kern,
        out_shape=jax.ShapeDtypeStruct((M, N), jnp.float32),
        grid=(pl.cdiv(M, TM),),
        in_specs=[
            pl.BlockSpec((TM, K), lambda i: (i, 0)),
            pl.BlockSpec((K, N), lambda i: (0, 0)),
            pl.BlockSpec((1, N), lambda i: (0, 0)),
        ],
        out_specs=pl.BlockSpec((TM, N), lambda i: (i, 0)),
        compiler_params=_cparams("parallel"),
    )(x, w_kn.astype(jnp.bfloat16), b.reshape(1, N).astype(jnp.float32))


# --------------------------------------------------------------------------
# Fused LayerNorm + to_qkv projection, emitted as (3, M, DIM) bf16
# --------------------------------------------------------------------------
def _ln_qkv_kernel(x_ref, g_ref, b_ref, w_ref, o_ref):
    x = x_ref[...]
    mu = jnp.mean(x, axis=-1, keepdims=True)
    xc = x - mu
    var = jnp.mean(xc * xc, axis=-1, keepdims=True)
    xn = xc * jax.lax.rsqrt(var + 1e-5) * g_ref[...] + b_ref[...]
    y = jnp.dot(xn.astype(jnp.bfloat16), w_ref[...],
                preferred_element_type=jnp.float32).astype(o_ref.dtype)
    o_ref[0] = y[:, :DIM]          # q  (512-lane stores)
    o_ref[1] = y[:, DIM:2 * DIM]   # k
    o_ref[2] = y[:, 2 * DIM:]      # v


def ln_linear_qkv(x2d, g, b, w_kn, tile_m=1024):
    """LayerNorm + bias-free qkv projection.  Output: (3, M, DIM) bf16."""
    M, K = x2d.shape
    TM = min(tile_m, M)
    return pl.pallas_call(
        _ln_qkv_kernel,
        out_shape=jax.ShapeDtypeStruct((3, M, DIM), jnp.bfloat16),
        grid=(pl.cdiv(M, TM),),
        in_specs=[
            pl.BlockSpec((TM, K), lambda i: (i, 0)),
            pl.BlockSpec((1, K), lambda i: (0, 0)),
            pl.BlockSpec((1, K), lambda i: (0, 0)),
            pl.BlockSpec((K, 3 * DIM), lambda i: (0, 0)),
        ],
        out_specs=pl.BlockSpec((3, TM, DIM), lambda i: (0, i, 0)),
        compiler_params=_cparams("parallel"),
    )(x2d, g.reshape(1, K), b.reshape(1, K), w_kn.astype(jnp.bfloat16))


# --------------------------------------------------------------------------
# Fused final LayerNorm (cls rows) + fc2 head
# --------------------------------------------------------------------------
def _ln_head_kernel(x_ref, g_ref, b_ref, w_ref, b2_ref, o_ref):
    x = x_ref[...]
    mu = jnp.mean(x, axis=-1, keepdims=True)
    xc = x - mu
    var = jnp.mean(xc * xc, axis=-1, keepdims=True)
    xn = xc * jax.lax.rsqrt(var + 1e-5) * g_ref[...] + b_ref[...]
    o_ref[...] = (jnp.dot(xn.astype(jnp.bfloat16), w_ref[...],
                          preferred_element_type=jnp.float32) + b2_ref[...])


def ln_head(x2d, g, b, w_kn, b2):
    M, C = x2d.shape
    N = w_kn.shape[1]
    return pl.pallas_call(
        _ln_head_kernel,
        out_shape=jax.ShapeDtypeStruct((M, N), jnp.float32),
        compiler_params=_cparams(),
    )(x2d, g.reshape(1, C), b.reshape(1, C), w_kn.astype(jnp.bfloat16),
      b2.reshape(1, N).astype(jnp.float32))


# --------------------------------------------------------------------------
# Fused Nystrom attention core: one (batch, head-pair) per grid step
# --------------------------------------------------------------------------
def _softmax_lastdim(s):
    s = s - jnp.max(s, axis=-1, keepdims=True)
    e = jnp.exp(s)
    return e / jnp.sum(e, axis=-1, keepdims=True)


def _nystrom_kernel(q_ref, k_ref, v_ref, rw_ref, o_ref, vpad_ref):
    """q/k/v_ref: (1,1,Np,128) bf16 (head 2*hp in lanes 0..63, 2*hp+1 in 64..127).
    rw_ref: (1,33,128) f32 residual conv taps per lane.  o_ref: (1,Np,128) bf16.
    vpad_ref: (Np+32, 128) bf16 scratch for the 33-tap residual conv."""
    Np = q_ref.shape[2]
    m = NUM_LANDMARKS
    l = Np // m
    scale = DIM_HEAD ** -0.5          # 0.125, exact in bf16
    pad = RES_CONV_K // 2

    q2 = q_ref[0, 0] * scale          # scale folded into q once (both heads)
    k2 = k_ref[0, 0]
    v2 = v_ref[0, 0]

    # ---- residual depthwise conv on v (both heads at once, per-lane taps) ----
    vpad_ref[0:pad, :] = jnp.zeros((pad, HD2), v2.dtype)
    vpad_ref[pad + Np:, :] = jnp.zeros((pad, HD2), v2.dtype)
    vpad_ref[pad:pad + Np, :] = v2
    rw = rw_ref[0]                                    # (33, 128) f32
    res = jnp.zeros((Np, HD2), jnp.float32)
    for t in range(RES_CONV_K):
        res = res + vpad_ref[t:t + Np, :].astype(jnp.float32) * rw[t:t + 1, :]

    # ---- landmarks: segment means over groups of l consecutive rows ---------
    if l == 1:
        ql2 = q2.astype(jnp.float32)                  # (m, 128)
        kl2 = k2.astype(jnp.float32)
    else:
        gg = jax.lax.broadcasted_iota(jnp.int32, (m, Np), 0)
        rr = jax.lax.broadcasted_iota(jnp.int32, (m, Np), 1)
        seg = ((rr >= gg * l) & (rr < (gg + 1) * l)).astype(jnp.bfloat16)
        inv_l = 1.0 / l
        ql2 = jnp.dot(seg, q2, preferred_element_type=jnp.float32) * inv_l
        kl2 = jnp.dot(seg, k2, preferred_element_type=jnp.float32) * inv_l

    ii = jax.lax.broadcasted_iota(jnp.int32, (m, m), 0)
    jj = jax.lax.broadcasted_iota(jnp.int32, (m, m), 1)
    eye = (ii == jj).astype(jnp.float32)

    def dot_nt(a, b):   # (M, K) x (N, K) -> (M, N), f32 accumulation on the MXU
        return jax.lax.dot_general(a, b, (((1,), (1,)), ((), ())),
                                   preferred_element_type=jnp.float32)

    outs = []
    for s in range(2):                                # the two heads of the pair
        lo = s * DIM_HEAD
        q = q2[:, lo:lo + DIM_HEAD]                   # (Np, 64) bf16 (scaled)
        k = k2[:, lo:lo + DIM_HEAD]
        v = v2[:, lo:lo + DIM_HEAD]
        ql = ql2[:, lo:lo + DIM_HEAD].astype(jnp.bfloat16)   # (m, 64)
        kl = kl2[:, lo:lo + DIM_HEAD].astype(jnp.bfloat16)

        attn1 = _softmax_lastdim(dot_nt(q, kl))       # (Np, m)
        attn2 = _softmax_lastdim(dot_nt(ql, kl))      # (m, m)
        attn3 = _softmax_lastdim(dot_nt(ql, k))       # (m, Np)

        # Moore-Penrose pinv of attn2: 6 Newton-Schulz iterations.  bf16 MXU
        # matmuls with f32 accumulation; combines / carried z stay in f32.
        # (Per-matrix row/col-sum max initializer: better conditioned than the
        #  reference's global-over-batch max; will not bit-match PyTorch.)
        x = attn2
        x_b = x.astype(jnp.bfloat16)
        abs_x = jnp.abs(x)
        col_max = jnp.max(jnp.sum(abs_x, axis=-1))
        row_max = jnp.max(jnp.sum(abs_x, axis=-2))
        z = jnp.swapaxes(x, 0, 1) / (col_max * row_max)

        def pinv_body(_, zc):
            z_b = zc.astype(jnp.bfloat16)
            xz = jnp.dot(x_b, z_b, preferred_element_type=jnp.float32)
            t1 = jnp.dot(xz.astype(jnp.bfloat16),
                         (7.0 * eye - xz).astype(jnp.bfloat16),
                         preferred_element_type=jnp.float32)
            t2 = jnp.dot(xz.astype(jnp.bfloat16),
                         (15.0 * eye - t1).astype(jnp.bfloat16),
                         preferred_element_type=jnp.float32)
            return 0.25 * jnp.dot(z_b, (13.0 * eye - t2).astype(jnp.bfloat16),
                                  preferred_element_type=jnp.float32)

        z = jax.lax.fori_loop(0, PINV_ITERS, pinv_body, z)

        # Re-associated output chain: attn1 @ (z @ (attn3 @ v)).
        out2 = jnp.dot(attn3.astype(jnp.bfloat16), v,
                       preferred_element_type=jnp.float32)              # (m, d)
        tmp = jnp.dot(z.astype(jnp.bfloat16), out2.astype(jnp.bfloat16),
                      preferred_element_type=jnp.float32)               # (m, d)
        out = jnp.dot(attn1.astype(jnp.bfloat16), tmp.astype(jnp.bfloat16),
                      preferred_element_type=jnp.float32)               # (Np, d)
        outs.append(out)

    # One 128-lane store per step (no masked 64-lane partial stores).
    o_ref[0] = (jnp.concatenate(outs, axis=-1) + res).astype(o_ref.dtype)


def nystrom_attn_core(qkv, rw_pairs):
    """qkv: (3, b, Np, DIM) bf16; rw_pairs: (HEADS//2, 33, 128) f32.
    Returns (b, Np, DIM) bf16 (heads already merged along the channel axis)."""
    _, b, Np, _ = qkv.shape
    return pl.pallas_call(
        _nystrom_kernel,
        out_shape=jax.ShapeDtypeStruct((b, Np, DIM), jnp.bfloat16),
        grid=(b, HEADS // 2),
        in_specs=[
            pl.BlockSpec((1, 1, Np, HD2), lambda bi, hp: (0, bi, 0, hp)),  # q
            pl.BlockSpec((1, 1, Np, HD2), lambda bi, hp: (1, bi, 0, hp)),  # k
            pl.BlockSpec((1, 1, Np, HD2), lambda bi, hp: (2, bi, 0, hp)),  # v
            pl.BlockSpec((1, RES_CONV_K, HD2), lambda bi, hp: (hp, 0, 0)),
        ],
        out_specs=pl.BlockSpec((1, Np, HD2), lambda bi, hp: (bi, 0, hp)),
        scratch_shapes=[pltpu.VMEM((Np + RES_CONV_K - 1, HD2), jnp.bfloat16)],
        compiler_params=_cparams("parallel", "parallel"),
    )(qkv, qkv, qkv, rw_pairs)


# --------------------------------------------------------------------------
# DCSPE fused depthwise 7x7 / 5x5 / 3x3 convs, tiled over (batch, channel)
# --------------------------------------------------------------------------
def _dcspe_kernel(x_ref, w7_ref, b7_ref, w5_ref, b5_ref, w3_ref, b3_ref,
                  w53_ref, b53_ref, o_ref, pad_ref):
    _, H, W, CT = x_ref.shape
    PAD = 3

    # zero only the 3-wide halo border; interior is always overwritten
    zrow = jnp.zeros((PAD, W + 2 * PAD, CT), jnp.float32)
    zcol = jnp.zeros((H + 2 * PAD, PAD, CT), jnp.float32)
    pad_ref[0:PAD, :, :] = zrow
    pad_ref[PAD + H:, :, :] = zrow
    pad_ref[:, 0:PAD, :] = zcol
    pad_ref[:, PAD + W:, :] = zcol

    x = x_ref[0]                                     # (H, W, CT)
    pad_ref[PAD:PAD + H, PAD:PAD + W, :] = x

    def dwconv(w_ref, b_ref, ksz):
        p = ksz // 2
        off = PAD - p
        w = w_ref[...]                               # (k, k, CT)
        acc = jnp.zeros((H, W, CT), jnp.float32)
        for di in range(ksz):
            for dj in range(ksz):
                acc = acc + (
                    pad_ref[off + di:off + di + H, off + dj:off + dj + W, :]
                    * w[di, dj][None, None, :])
        return acc + b_ref[...]

    # x + proj1(x) + proj2(x): 3x3 taps fused into the 5x5 loop (w53 = w5 + w3).
    acc = x + dwconv(w53_ref, b53_ref, 5)
    px = dwconv(w7_ref, b7_ref, 7)                   # proj(x)  (pad still holds x)
    acc = acc + px
    pad_ref[PAD:PAD + H, PAD:PAD + W, :] = px
    t = dwconv(w5_ref, b5_ref, 5)                    # proj1(proj(x))
    pad_ref[PAD:PAD + H, PAD:PAD + W, :] = t
    t = dwconv(w3_ref, b3_ref, 3)                    # proj2(proj1(proj(x)))
    o_ref[0] = acc + t


def dcspe_conv(x_nhwc, w7, b7, w5, b5, w3, b3):
    B, H, W, C = x_nhwc.shape
    CT = 128 if C % 128 == 0 else C                  # channel tile (no halo needed)
    w53 = w5 + jnp.pad(w3, ((1, 1), (1, 1), (0, 0)))  # embed 3x3 in 5x5 center
    b53 = b5 + b3
    return pl.pallas_call(
        _dcspe_kernel,
        out_shape=jax.ShapeDtypeStruct((B, H, W, C), jnp.float32),
        grid=(B, C // CT),
        in_specs=[
            pl.BlockSpec((1, H, W, CT), lambda b, c: (b, 0, 0, c)),
            pl.BlockSpec((7, 7, CT), lambda b, c: (0, 0, c)),
            pl.BlockSpec((1, 1, CT), lambda b, c: (0, 0, c)),
            pl.BlockSpec((5, 5, CT), lambda b, c: (0, 0, c)),
            pl.BlockSpec((1, 1, CT), lambda b, c: (0, 0, c)),
            pl.BlockSpec((3, 3, CT), lambda b, c: (0, 0, c)),
            pl.BlockSpec((1, 1, CT), lambda b, c: (0, 0, c)),
            pl.BlockSpec((5, 5, CT), lambda b, c: (0, 0, c)),
            pl.BlockSpec((1, 1, CT), lambda b, c: (0, 0, c)),
        ],
        out_specs=pl.BlockSpec((1, H, W, CT), lambda b, c: (b, 0, 0, c)),
        scratch_shapes=[pltpu.VMEM((H + 6, W + 6, CT), jnp.float32)],
        compiler_params=_cparams("parallel", "parallel"),
    )(x_nhwc, w7, b7, w5, b5, w3, b3, w53, b53)


# --------------------------------------------------------------------------
# Model pieces (JAX glue around the Pallas kernels)
# --------------------------------------------------------------------------
def translayer(x, p):
    b, n, d = x.shape
    m = NUM_LANDMARKS

    # Fused LayerNorm + to_qkv, written as (3, b*n, dim) bf16 -> no XLA
    # transposes / casts of the activations before the attention kernel.
    qkv = ln_linear_qkv(x.reshape(b * n, d), p['norm_g'], p['norm_b'],
                        p['to_qkv_w'])                       # (3, b*n, DIM) bf16
    qkv = qkv.reshape(3, b, n, DIM)

    # Zero-pad the sequence at the FRONT to a multiple of the landmark count.
    # Reference pads before to_qkv; since to_qkv has no bias this is equivalent.
    remainder = n % m
    pad = (m - remainder) if remainder > 0 else 0
    if pad:
        qkv = jnp.pad(qkv, ((0, 0), (0, 0), (pad, 0), (0, 0)))
    Np = n + pad

    out = nystrom_attn_core(qkv, p['res_conv_wp'])           # (b, Np, DIM) bf16
    out = out[:, -n:]                                        # drop front padding
    out = linear(out.reshape(b * n, DIM), p['to_out_w'],
                 p['to_out_b']).reshape(b, n, DIM)
    return x + out


def dcspe(x, H, W, p):
    B, N, C = x.shape
    cls_tok = x[:, :1]
    feat = x[:, 1:].reshape(B, H, W, C)          # NHWC (channels-last) layout
    y = dcspe_conv(feat, p['w7'], p['b7'], p['w5'], p['b5'], p['w3'], p['b3'])
    # TODO(synk): TA(dim) definition not provided in the reference; identity.
    y = y.reshape(B, H * W, C)
    return jnp.concatenate([cls_tok, y], axis=1)


def forward(x, params):
    B, N0, Din = x.shape
    x = x.astype(jnp.float32)

    h = linear(x.reshape(B * N0, Din), params['fc1_w'], params['fc1_b'],
               relu=True).reshape(B, N0, DIM)

    _H = int(math.ceil(math.sqrt(N0)))
    _W = _H
    add_length = _H * _W - N0
    h = jnp.concatenate([h, h[:, :add_length, :]], axis=1)

    cls = jnp.broadcast_to(params['cls_token'], (B, 1, DIM)).astype(jnp.float32)
    h = jnp.concatenate([cls, h], axis=1)

    h = translayer(h, params['layer1'])
    h = dcspe(h, _H, _W, params['pos'])
    h = translayer(h, params['layer2'])

    # Final LayerNorm + fc2 only on the cls rows (the only rows used downstream).
    logits = ln_head(h[:, 0], params['norm_g'], params['norm_b'],
                     params['fc2_w'], params['fc2_b'])
    Y_hat = jnp.argmax(logits, axis=1)
    Y_prob = jax.nn.softmax(logits, axis=1)
    return {'logits': logits, 'Y_prob': Y_prob, 'Y_hat': Y_hat}


# --------------------------------------------------------------------------
# Deterministic parameter init (synthetic weights, shapes from __init__).
# Linear weights stored pre-transposed (K, N) in bf16 for the MXU.
# --------------------------------------------------------------------------
def _res_conv_pairs(rw):
    """(HEADS, K) depthwise taps -> (HEADS//2, K, 128): even head in lanes
    0..63, odd head in lanes 64..127 (matches the 2-heads-per-step packing)."""
    a = jnp.repeat(rw[0::2][:, :, None], DIM_HEAD, axis=2)
    b = jnp.repeat(rw[1::2][:, :, None], DIM_HEAD, axis=2)
    return jnp.concatenate([a, b], axis=2).astype(jnp.float32)


def init_params(key, n_classes=2, dim=DIM):
    keys = iter(jax.random.split(key, 32))

    def rnd(shape, scale=0.02, dtype=jnp.float32):
        return (jax.random.normal(next(keys), shape, jnp.float32) * scale
                ).astype(dtype)

    def layer_params():
        return {
            'norm_g': jnp.ones((dim,), jnp.float32),
            'norm_b': jnp.zeros((dim,), jnp.float32),
            'to_qkv_w': rnd((dim, 3 * dim), dtype=jnp.bfloat16),   # no bias
            'to_out_w': rnd((dim, dim), dtype=jnp.bfloat16),
            'to_out_b': jnp.zeros((dim,), jnp.float32),
            'res_conv_wp': _res_conv_pairs(rnd((HEADS, RES_CONV_K))),
        }

    return {
        'fc1_w': rnd((1024, dim), dtype=jnp.bfloat16),
        'fc1_b': jnp.zeros((dim,), jnp.float32),
        'cls_token': rnd((1, 1, dim), scale=1.0),
        'layer1': layer_params(),
        'layer2': layer_params(),
        'pos': {
            'w7': rnd((7, 7, dim)),
            'b7': jnp.zeros((1, 1, dim), jnp.float32),
            'w5': rnd((5, 5, dim)),
            'b5': jnp.zeros((1, 1, dim), jnp.float32),
            'w3': rnd((3, 3, dim)),
            'b3': jnp.zeros((1, 1, dim), jnp.float32),
        },
        'norm_g': jnp.ones((dim,), jnp.float32),
        'norm_b': jnp.zeros((dim,), jnp.float32),
        'fc2_w': rnd((dim, n_classes), dtype=jnp.bfloat16),
        'fc2_b': jnp.zeros((n_classes,), jnp.float32),
    }


if __name__ == "__main__":
    key = jax.random.PRNGKey(0)
    pkey, xkey = jax.random.split(key)
    params = init_params(pkey, n_classes=2)

    # x: bag of 8 patch features of dim 1024, batch of 2 slides.
    x = jax.random.normal(xkey, (2, 8, 1024), jnp.float32)

    out = forward(x, params)
    jax.block_until_ready(out['logits'])
    jax.block_until_ready(out['Y_prob'])
    jax.block_until_ready(out['Y_hat'])

    assert out['logits'].shape == (2, 2)
    assert out['Y_prob'].shape == (2, 2)
    assert out['Y_hat'].shape == (2,)
    assert bool(jnp.all(jnp.isfinite(out['logits'])))
    print("KERNEL_OK")
</pallas_src>

<mosaic_0001>
module attributes {stable_mosaic.version = 11 : i64} {
  func.func @_linear_relu_kernel(%arg0: i32, %arg1: memref<16x1024xf32, #tpu.memory_space<vmem>>, %arg2: memref<1024x512xbf16, #tpu.memory_space<vmem>>, %arg3: memref<1x512xf32, #tpu.memory_space<vmem>>, %arg4: memref<16x512xf32, #tpu.memory_space<vmem>>) attributes {dimension_semantics = [#tpu.dimension_semantics<parallel>], iteration_bounds = array<i64: 1>, scalar_prefetch = 0 : i64, scratch_operands = 0 : i64, tpu.core_type = #tpu.core_type<tc>, window_params = [{transform_indices = @transform_0, window_bounds = array<i64: 16, 1024>}, {pipeline_mode = #tpu.pipeline_mode<synchronous>, transform_indices = @transform_1, window_bounds = array<i64: 1024, 512>}, {pipeline_mode = #tpu.pipeline_mode<synchronous>, transform_indices = @transform_2, window_bounds = array<i64: 1, 512>}, {transform_indices = @transform_3, window_bounds = array<i64: 16, 512>}]} {
    %c0 = arith.constant 0 : index
    %c0_0 = arith.constant 0 : index
    %0 = vector.load %arg1[%c0, %c0_0] : memref<16x1024xf32, #tpu.memory_space<vmem>>, vector<16x1024xf32>
    %1 = arith.truncf %0 : vector<16x1024xf32> to vector<16x1024xbf16>
    %c0_1 = arith.constant 0 : index
    %c0_2 = arith.constant 0 : index
    %2 = vector.load %arg2[%c0_1, %c0_2] : memref<1024x512xbf16, #tpu.memory_space<vmem>>, vector<1024x512xbf16>
    %cst = arith.constant dense<0.000000e+00> : vector<16x512xf32>
    %3 = tpu.matmul %1, %2, %cst {dimension_numbers = #tpu.dot_dimension_numbers<[1], [0], [0], [1], [0, 0, 1, 1], [], []>} : vector<16x1024xbf16>, vector<1024x512xbf16>, vector<16x512xf32> -> vector<16x512xf32>
    %c0_3 = arith.constant 0 : index
    %c0_4 = arith.constant 0 : index
    %4 = vector.load %arg3[%c0_3, %c0_4] : memref<1x512xf32, #tpu.memory_space<vmem>>, vector<1x512xf32>
    %5 = vector.broadcast %4 : vector<1x512xf32> to vector<16x512xf32>
    %6 = arith.addf %3, %5 : vector<16x512xf32>
    %cst_5 = arith.constant 0.000000e+00 : f32
    %7 = vector.broadcast %cst_5 : f32 to vector<16x512xf32>
    %8 = arith.maximumf %6, %7 : vector<16x512xf32>
    %c0_6 = arith.constant 0 : index
    %c0_7 = arith.constant 0 : index
    %9 = vector.load %arg4[%c0_6, %c0_7] : memref<16x512xf32, #tpu.memory_space<vmem>>, vector<16x512xf32>
    tpu.vector_store %arg4[%c0_6, %c0_7], %8 {strides = array<i32>} : memref<16x512xf32, #tpu.memory_space<vmem>>, vector<16x512xf32>,
    return
  }
  func.func @transform_0(%arg0: i32) -> (i32, i32) {
    %c0_i32 = arith.constant 0 : i32
    %c0_i32_0 = arith.constant 0 : i32
    return %arg0, %c0_i32 : i32, i32
  }
  func.func @transform_1(%arg0: i32) -> (i32, i32) {
    %c0_i32 = arith.constant 0 : i32
    %c0_i32_0 = arith.constant 0 : i32
    %c0_i32_1 = arith.constant 0 : i32
    return %c0_i32, %c0_i32_0 : i32, i32
  }
  func.func @transform_2(%arg0: i32) -> (i32, i32) {
    %c0_i32 = arith.constant 0 : i32
    %c0_i32_0 = arith.constant 0 : i32
    %c0_i32_1 = arith.constant 0 : i32
    return %c0_i32, %c0_i32_0 : i32, i32
  }
  func.func @transform_3(%arg0: i32) -> (i32, i32) {
    %c0_i32 = arith.constant 0 : i32
    %c0_i32_0 = arith.constant 0 : i32
    return %arg0, %c0_i32 : i32, i32
  }
}

</mosaic_0001>

<llo_original>
// kernel: tpu_custom_call.1
$region0: #{tpu_custom_call.1}
  #allocation0 [shape = 'u32[]', space=smem, size = 0x4, offset = 0x4, fixed_abs, tag = 'smem constant byte address 0x4 - core index']
  #allocation1 [shape = 'u32[72,128]{1,0:T(1,128)}', space=vmem, size = 0x9000, scoped, tag = 'internal scratch']
  %s0 = inlined_call_operand.hbm [shape: f32[16,1024], index: 0, kind: input, shape index: {}]
  %s1 = inlined_call_operand.hbm [shape: bf16[1024,512], index: 1, kind: input, shape index: {}]
  %s2 = inlined_call_operand.hbm [shape: f32[1,512], index: 2, kind: input, shape index: {}]
  %s3 = inlined_call_operand.hbm [shape: f32[16,512], index: 3, kind: output, shape index: {}]
  %s4 = sld [smem:[#allocation0]]
  $region34: #{tpu_custom_call.1} parent=0
    _
  %s6 = ssub.s32 1, %s4
  %s7 = scalar_select 0, %s6, %s4
  $region1: #{tpu_custom_call.1} parent=0
    #allocation2 [shape = 'u8[65536]{0}', space=vmem, size = 0x10000, scoped, tag = 'input window, operand 0, single buffered']
    #allocation3 [shape = 's32[1]{0}', space=sflag, size = 0x4, scoped, tag = 'scoped memory for tpu_custom_call.1']
    #allocation4 [shape = 's32[1]{0}', space=sflag, size = 0x4, scoped, tag = 'scoped memory for tpu_custom_call.1']
    #allocation5 [shape = 'u8[1048576]{0}', space=vmem, size = 0x100000, scoped, tag = 'input window, operand 1, single buffered']
    #allocation6 [shape = 's32[1]{0}', space=sflag, size = 0x4, scoped, tag = 'scoped memory for tpu_custom_call.1']
    #allocation7 [shape = 'u8[2048]{0}', space=vmem, size = 0x800, scoped, tag = 'input window, operand 2, single buffered']
    #allocation8 [shape = 'u8[32768]{0}', space=vmem, size = 0x8000, scoped, tag = 'output window, operand 0, single buffered']
    %8 = vsyncpa [#allocation3], 0
    %9 = vsyncpa [#allocation6], 0
    %10 = vsyncpa [#allocation4], 0
    // Predicated region
    $region2: #{tpu_custom_call.1} parent=1 // pred_check
      _
    $region3: #{tpu_custom_call.1} parent=1 // pred_check_branch
      %12 = sbr.rel (0) target = $region5
    $region4: #{tpu_custom_call.1} parent=1 // pred_region
      %14 = vsyncadd [#allocation3], 0
      %s15 = sshll.u32 %s0, 4
      %s16 = int_to_ptr.hbm [resolvable:$true] %s15
      %s17 = sshll.u32 [#allocation2], 4
      %s18 = int_to_ptr.vmem [resolvable:$true] %s17
      %23 = dma.hbm_to_vmem [thread:$0]  %s16, 2048, %s18, [#allocation3], 1024, 1024, 64
    $region5: #{tpu_custom_call.1} parent=1 // pred_fallthru
      _
    // Predicated region
    $region6: #{tpu_custom_call.1} parent=1 // pred_check
      _
    $region7: #{tpu_custom_call.1} parent=1 // pred_check_branch
      %25 = sbr.rel (0) target = $region9
    $region8: #{tpu_custom_call.1} parent=1 // pred_region
      %27 = vsyncadd [#allocation6], 0
      %s28 = sshll.u32 %s1, 4
      %s29 = int_to_ptr.hbm [resolvable:$true] %s28
      %s30 = sshll.u32 [#allocation5], 4
      %s31 = int_to_ptr.vmem [resolvable:$true] %s30
      %36 = dma.hbm_to_vmem [thread:$0]  %s29, 32768, %s31, [#allocation6], 256, 256, 16
    $region9: #{tpu_custom_call.1} parent=1 // pred_fallthru
      _
    // Predicated region
    $region10: #{tpu_custom_call.1} parent=1 // pred_check
      _
    $region11: #{tpu_custom_call.1} parent=1 // pred_check_branch
      %38 = sbr.rel (0) target = $region13
    $region12: #{tpu_custom_call.1} parent=1 // pred_region
      %40 = vsyncadd [#allocation6], 0
      %s42 = sshll.u32 %s2, 4
      %s43 = int_to_ptr.hbm [resolvable:$true] %s42
      %s44 = sshll.u32 [#allocation7], 4
      %s45 = int_to_ptr.vmem [resolvable:$true] %s44
      %47 = dma.hbm_to_vmem [thread:$0]  %s43, 64, %s45, [#allocation6]
    $region13: #{tpu_custom_call.1} parent=1 // pred_fallthru
      _
    // Predicated region
    $region14: #{tpu_custom_call.1} parent=1 // pred_check
      _
    $region15: #{tpu_custom_call.1} parent=1 // pred_check_branch
      %49 = sbr.rel (0) target = $region17
    $region16: #{tpu_custom_call.1} parent=1 // pred_region
      %51 = dma.done [#allocation3], 2048
    $region17: #{tpu_custom_call.1} parent=1 // pred_fallthru
      _
    // Predicated region
    $region18: #{tpu_custom_call.1} parent=1 // pred_check
      _
    $region19: #{tpu_custom_call.1} parent=1 // pred_check_branch
      %53 = sbr.rel (0) target = $region21
    $region20: #{tpu_custom_call.1} parent=1 // pred_region
      %55 = dma.done [#allocation6], 32768
    $region21: #{tpu_custom_call.1} parent=1 // pred_fallthru
      _
    // Predicated region
    $region22: #{tpu_custom_call.1} parent=1 // pred_check
      _
    $region23: #{tpu_custom_call.1} parent=1 // pred_check_branch
      %57 = sbr.rel (0) target = $region25
    $region24: #{tpu_custom_call.1} parent=1 // pred_region
      %59 = dma.done [#allocation6], 64
    $region25: #{tpu_custom_call.1} parent=1 // pred_fallthru
      _
    %v60 = vld [vmem:[#allocation2] sm:$0xff]
    %v61 = vld [vmem:[#allocation2 + $0x8] sm:$0xff]
    %v62 = vld [vmem:[#allocation2 + $0x10] sm:$0xff]
    %v63 = vld [vmem:[#allocation2 + $0x18] sm:$0xff]
    %v64 = vld [vmem:[#allocation2 + $0x20] sm:$0xff]
    %v65 = vld [vmem:[#allocation2 + $0x28] sm:$0xff]
    %v66 = vld [vmem:[#allocation2 + $0x30] sm:$0xff]
    %v67 = vld [vmem:[#allocation2 + $0x38] sm:$0xff]
    %v68 = vld [vmem:[#allocation2 + $0x40] sm:$0xff]
    %v69 = vld [vmem:[#allocation2 + $0x48] sm:$0xff]
    %v70 = vld [vmem:[#allocation2 + $0x50] sm:$0xff]
    %v71 = vld [vmem:[#allocation2 + $0x58] sm:$0xff]
    %v72 = vld [vmem:[#allocation2 + $0x60] sm:$0xff]
    %v73 = vld [vmem:[#allocation2 + $0x68] sm:$0xff]
    %v74 = vld [vmem:[#allocation2 + $0x70] sm:$0xff]
    %v75 = vld [vmem:[#allocation2 + $0x78] sm:$0xff]
    %v76 = vpack.c.bf16 %v68, %v60
    %v77 = vpack.c.bf16 %v69, %v61
    %v78 = vpack.c.bf16 %v70, %v62
    %v79 = vpack.c.bf16 %v71, %v63
    %v80 = vpack.c.bf16 %v72, %v64
    %v81 = vpack.c.bf16 %v73, %v65
    %v82 = vpack.c.bf16 %v74, %v66
    %v83 = vpack.c.bf16 %v75, %v67
    %v84 = vld [vmem:[#allocation5] sm:$0xff]
    %v85 = vld [vmem:[#allocation5 + $0x8] sm:$0xff]
    %v86 = vld [vmem:[#allocation5 + $0x10] sm:$0xff]
    %v87 = vld [vmem:[#allocation5 + $0x18] sm:$0xff]
    %v88 = vld [vmem:[#allocation5 + $0x20] sm:$0xff]
    %v89 = vld [vmem:[#allocation5 + $0x28] sm:$0xff]
    %v90 = vld [vmem:[#allocation5 + $0x30] sm:$0xff]
    %v91 = vld [vmem:[#allocation5 + $0x38] sm:$0xff]
    %v92 = vld [vmem:[#allocation5 + $0x40] sm:$0xff]
    %v93 = vld [vmem:[#allocation5 + $0x48] sm:$0xff]
    %v94 = vld [vmem:[#allocation5 + $0x50] sm:$0xff]
    %v95 = vld [vmem:[#allocation5 + $0x58] sm:$0xff]
    %v96 = vld [vmem:[#allocation5 + $0x60] sm:$0xff]
    %v97 = vld [vmem:[#allocation5 + $0x68] sm:$0xff]
    %v98 = vld [vmem:[#allocation5 + $0x70] sm:$0xff]
    %v99 = vld [vmem:[#allocation5 + $0x78] sm:$0xff]
    %v100 = vld [vmem:[#allocation5 + $0x80] sm:$0xff]
    %v101 = vld [vmem:[#allocation5 + $0x88] sm:$0xff]
    %v102 = vld [vmem:[#allocation5 + $0x90] sm:$0xff]
    %v103 = vld [vmem:[#allocation5 + $0x98] sm:$0xff]
    %v104 = vld [vmem:[#allocation5 + $0xa0] sm:$0xff]
    %v105 = vld [vmem:[#allocation5 + $0xa8] sm:$0xff]
    %v106 = vld [vmem:[#allocation5 + $0xb0] sm:$0xff]
    %v107 = vld [vmem:[#allocation5 + $0xb8] sm:$0xff]
    %v108 = vld [vmem:[#allocation5 + $0xc0] sm:$0xff]
    %v109 = vld [vmem:[#allocation5 + $0xc8] sm:$0xff]
    %v110 = vld [vmem:[#allocation5 + $0xd0] sm:$0xff]
    %v111 = vld [vmem:[#allocation5 + $0xd8] sm:$0xff]
    %v112 = vld [vmem:[#allocation5 + $0xe0] sm:$0xff]
    %v113 = vld [vmem:[#allocation5 + $0xe8] sm:$0xff]
    %v114 = vld [vmem:[#allocation5 + $0xf0] sm:$0xff]
    %v115 = vld [vmem:[#allocation5 + $0xf8] sm:$0xff]
    %v116 = vld [vmem:[#allocation5 + $0x100] sm:$0xff]
    %v117 = vld [vmem:[#allocation5 + $0x108] sm:$0xff]
    %v118 = vld [vmem:[#allocation5 + $0x110] sm:$0xff]
    %v119 = vld [vmem:[#allocation5 + $0x118] sm:$0xff]
    %v120 = vld [vmem:[#allocation5 + $0x120] sm:$0xff]
    %v121 = vld [vmem:[#allocation5 + $0x128] sm:$0xff]
    %v122 = vld [vmem:[#allocation5 + $0x130] sm:$0xff]
    %v123 = vld [vmem:[#allocation5 + $0x138] sm:$0xff]
    %v124 = vld [vmem:[#allocation5 + $0x140] sm:$0xff]
    %v125 = vld [vmem:[#allocation5 + $0x148] sm:$0xff]
    %v126 = vld [vmem:[#allocation5 + $0x150] sm:$0xff]
    %v127 = vld [vmem:[#allocation5 + $0x158] sm:$0xff]
    %v128 = vld [vmem:[#allocation5 + $0x160] sm:$0xff]
    %v129 = vld [vmem:[#allocation5 + $0x168] sm:$0xff]
    %v130 = vld [vmem:[#allocation5 + $0x170] sm:$0xff]
    %v131 = vld [vmem:[#allocation5 + $0x178] sm:$0xff]
    %v132 = vld [vmem:[#allocation5 + $0x180] sm:$0xff]
    %v133 = vld [vmem:[#allocation5 + $0x188] sm:$0xff]
    %v134 = vld [vmem:[#allocation5 + $0x190] sm:$0xff]
    %v135 = vld [vmem:[#allocation5 + $0x198] sm:$0xff]
    %v136 = vld [vmem:[#allocation5 + $0x1a0] sm:$0xff]
    %v137 = vld [vmem:[#allocation5 + $0x1a8] sm:$0xff]
    %v138 = vld [vmem:[#allocation5 + $0x1b0] sm:$0xff]
    %v139 = vld [vmem:[#allocation5 + $0x1b8] sm:$0xff]
    %v140 = vld [vmem:[#allocation5 + $0x1c0] sm:$0xff]
    %v141 = vld [vmem:[#allocation5 + $0x1c8] sm:$0xff]
    %v142 = vld [vmem:[#allocation5 + $0x1d0] sm:$0xff]
    %v143 = vld [vmem:[#allocation5 + $0x1d8] sm:$0xff]
    %v144 = vld [vmem:[#allocation5 + $0x1e0] sm:$0xff]
    %v145 = vld [vmem:[#allocation5 + $0x1e8] sm:$0xff]
    %v146 = vld [vmem:[#allocation5 + $0x1f0] sm:$0xff]
    %v147 = vld [vmem:[#allocation5 + $0x1f8] sm:$0xff]
    %v148 = vld [vmem:[#allocation5 + $0x200] sm:$0xff]
    %v149 = vld [vmem:[#allocation5 + $0x208] sm:$0xff]
    %v150 = vld [vmem:[#allocation5 + $0x210] sm:$0xff]
    %v151 = vld [vmem:[#allocation5 + $0x218] sm:$0xff]
    %v152 = vld [vmem:[#allocation5 + $0x220] sm:$0xff]
    %v153 = vld [vmem:[#allocation5 + $0x228] sm:$0xff]
    %v154 = vld [vmem:[#allocation5 + $0x230] sm:$0xff]
    %v155 = vld [vmem:[#allocation5 + $0x238] sm:$0xff]
    %v156 = vld [vmem:[#allocation5 + $0x240] sm:$0xff]
    %v157 = vld [vmem:[#allocation5 + $0x248] sm:$0xff]
    %v158 = vld [vmem:[#allocation5 + $0x250] sm:$0xff]
    %v159 = vld [vmem:[#allocation5 + $0x258] sm:$0xff]
    %v160 = vld [vmem:[#allocation5 + $0x260] sm:$0xff]
    %v161 = vld [vmem:[#allocation5 + $0x268] sm:$0xff]
    %v162 = vld [vmem:[#allocation5 + $0x270] sm:$0xff]
    %v163 = vld [vmem:[#allocation5 + $0x278] sm:$0xff]
    %v164 = vld [vmem:[#allocation5 + $0x280] sm:$0xff]
    %v165 = vld [vmem:[#allocation5 + $0x288] sm:$0xff]
    %v166 = vld [vmem:[#allocation5 + $0x290] sm:$0xff]
    %v167 = vld [vmem:[#allocation5 + $0x298] sm:$0xff]
    %v168 = vld [vmem:[#allocation5 + $0x2a0] sm:$0xff]
    %v169 = vld [vmem:[#allocation5 + $0x2a8] sm:$0xff]
    %v170 = vld [vmem:[#allocation5 + $0x2b0] sm:$0xff]
    %v171 = vld [vmem:[#allocation5 + $0x2b8] sm:$0xff]
    %v172 = vld [vmem:[#allocation5 + $0x2c0] sm:$0xff]
    %v173 = vld [vmem:[#allocation5 + $0x2c8] sm:$0xff]
    %v174 = vld [vmem:[#allocation5 + $0x2d0] sm:$0xff]
    %v175 = vld [vmem:[#allocation5 + $0x2d8] sm:$0xff]
    %v176 = vld [vmem:[#allocation5 + $0x2e0] sm:$0xff]
    %v177 = vld [vmem:[#allocation5 + $0x2e8] sm:$0xff]
    %v178 = vld [vmem:[#allocation5 + $0x2f0] sm:$0xff]
    %v179 = vld [vmem:[#allocation5 + $0x2f8] sm:$0xff]
    %v180 = vld [vmem:[#allocation5 + $0x300] sm:$0xff]
    %v181 = vld [vmem:[#allocation5 + $0x308] sm:$0xff]
    %v182 = vld [vmem:[#allocation5 + $0x310] sm:$0xff]
    %v183 = vld [vmem:[#allocation5 + $0x318] sm:$0xff]
    %v184 = vld [vmem:[#allocation5 + $0x320] sm:$0xff]
    %v185 = vld [vmem:[#allocation5 + $0x328] sm:$0xff]
    %v186 = vld [vmem:[#allocation5 + $0x330] sm:$0xff]
    %v187 = vld [vmem:[#allocation5 + $0x338] sm:$0xff]
    %v188 = vld [vmem:[#allocation5 + $0x340] sm:$0xff]
    %v189 = vld [vmem:[#allocation5 + $0x348] sm:$0xff]
    %v190 = vld [vmem:[#allocation5 + $0x350] sm:$0xff]
    %v191 = vld [vmem:[#allocation5 + $0x358] sm:$0xff]
    %v192 = vld [vmem:[#allocation5 + $0x360] sm:$0xff]
    %v193 = vld [vmem:[#allocation5 + $0x368] sm:$0xff]
    %v194 = vld [vmem:[#allocation5 + $0x370] sm:$0xff]
    %v195 = vld [vmem:[#allocation5 + $0x378] sm:$0xff]
    %v196 = vld [vmem:[#allocation5 + $0x380] sm:$0xff]
    %v197 = vld [vmem:[#allocation5 + $0x388] sm:$0xff]
    %v198 = vld [vmem:[#allocation5 + $0x390] sm:$0xff]
    %v199 = vld [vmem:[#allocation5 + $0x398] sm:$0xff]
    %v200 = vld [vmem:[#allocation5 + $0x3a0] sm:$0xff]
    %v201 = vld [vmem:[#allocation5 + $0x3a8] sm:$0xff]
    %v202 = vld [vmem:[#allocation5 + $0x3b0] sm:$0xff]
    %v203 = vld [vmem:[#allocation5 + $0x3b8] sm:$0xff]
    %v204 = vld [vmem:[#allocation5 + $0x3c0] sm:$0xff]
    %v205 = vld [vmem:[#allocation5 + $0x3c8] sm:$0xff]
    %v206 = vld [vmem:[#allocation5 + $0x3d0] sm:$0xff]
    %v207 = vld [vmem:[#allocation5 + $0x3d8] sm:$0xff]
    %v208 = vld [vmem:[#allocation5 + $0x3e0] sm:$0xff]
    %v209 = vld [vmem:[#allocation5 + $0x3e8] sm:$0xff]
    %v210 = vld [vmem:[#allocation5 + $0x3f0] sm:$0xff]
    %v211 = vld [vmem:[#allocation5 + $0x3f8] sm:$0xff]
    %v212 = vld [vmem:[#allocation5 + $0x400] sm:$0xff]
    %v213 = vld [vmem:[#allocation5 + $0x408] sm:$0xff]
    %v214 = vld [vmem:[#allocation5 + $0x410] sm:$0xff]
    %v215 = vld [vmem:[#allocation5 + $0x418] sm:$0xff]
    %v216 = vld [vmem:[#allocation5 + $0x420] sm:$0xff]
    %v217 = vld [vmem:[#allocation5 + $0x428] sm:$0xff]
    %v218 = vld [vmem:[#allocation5 + $0x430] sm:$0xff]
    %v219 = vld [vmem:[#allocation5 + $0x438] sm:$0xff]
    %v220 = vld [vmem:[#allocation5 + $0x440] sm:$0xff]
    %v221 = vld [vmem:[#allocation5 + $0x448] sm:$0xff]
    %v222 = vld [vmem:[#allocation5 + $0x450] sm:$0xff]
    %v223 = vld [vmem:[#allocation5 + $0x458] sm:$0xff]
    %v224 = vld [vmem:[#allocation5 + $0x460] sm:$0xff]
    %v225 = vld [vmem:[#allocation5 + $0x468] sm:$0xff]
    %v226 = vld [vmem:[#allocation5 + $0x470] sm:$0xff]
    %v227 = vld [vmem:[#allocation5 + $0x478] sm:$0xff]
    %v228 = vld [vmem:[#allocation5 + $0x480] sm:$0xff]
    %v229 = vld [vmem:[#allocation5 + $0x488] sm:$0xff]
    %v230 = vld [vmem:[#allocation5 + $0x490] sm:$0xff]
    %v231 = vld [vmem:[#allocation5 + $0x498] sm:$0xff]
    %v232 = vld [vmem:[#allocation5 + $0x4a0] sm:$0xff]
    %v233 = vld [vmem:[#allocation5 + $0x4a8] sm:$0xff]
    %v234 = vld [vmem:[#allocation5 + $0x4b0] sm:$0xff]
    %v235 = vld [vmem:[#allocation5 + $0x4b8] sm:$0xff]
    %v236 = vld [vmem:[#allocation5 + $0x4c0] sm:$0xff]
    %v237 = vld [vmem:[#allocation5 + $0x4c8] sm:$0xff]
    %v238 = vld [vmem:[#allocation5 + $0x4d0] sm:$0xff]
    %v239 = vld [vmem:[#allocation5 + $0x4d8] sm:$0xff]
    %v240 = vld [vmem:[#allocation5 + $0x4e0] sm:$0xff]
    %v241 = vld [vmem:[#allocation5 + $0x4e8] sm:$0xff]
    %v242 = vld [vmem:[#allocation5 + $0x4f0] sm:$0xff]
    %v243 = vld [vmem:[#allocation5 + $0x4f8] sm:$0xff]
    %v244 = vld [vmem:[#allocation5 + $0x500] sm:$0xff]
    %v245 = vld [vmem:[#allocation5 + $0x508] sm:$0xff]
    %v246 = vld [vmem:[#allocation5 + $0x510] sm:$0xff]
    %v247 = vld [vmem:[#allocation5 + $0x518] sm:$0xff]
    %v248 = vld [vmem:[#allocation5 + $0x520] sm:$0xff]
    %v249 = vld [vmem:[#allocation5 + $0x528] sm:$0xff]
    %v250 = vld [vmem:[#allocation5 + $0x530] sm:$0xff]
    %v251 = vld [vmem:[#allocation5 + $0x538] sm:$0xff]
    %v252 = vld [vmem:[#allocation5 + $0x540] sm:$0xff]
    %v253 = vld [vmem:[#allocation5 + $0x548] sm:$0xff]
    %v254 = vld [vmem:[#allocation5 + $0x550] sm:$0xff]
    %v255 = vld [vmem:[#allocation5 + $0x558] sm:$0xff]
    %v256 = vld [vmem:[#allocation5 + $0x560] sm:$0xff]
    %v257 = vld [vmem:[#allocation5 + $0x568] sm:$0xff]
    %v258 = vld [vmem:[#allocation5 + $0x570] sm:$0xff]
    %v259 = vld [vmem:[#allocation5 + $0x578] sm:$0xff]
    %v260 = vld [vmem:[#allocation5 + $0x580] sm:$0xff]
    %v261 = vld [vmem:[#allocation5 + $0x588] sm:$0xff]
    %v262 = vld [vmem:[#allocation5 + $0x590] sm:$0xff]
    %v263 = vld [vmem:[#allocation5 + $0x598] sm:$0xff]
    %v264 = vld [vmem:[#allocation5 + $0x5a0] sm:$0xff]
    %v265 = vld [vmem:[#allocation5 + $0x5a8] sm:$0xff]
    %v266 = vld [vmem:[#allocation5 + $0x5b0] sm:$0xff]
    %v267 = vld [vmem:[#allocation5 + $0x5b8] sm:$0xff]
    %v268 = vld [vmem:[#allocation5 + $0x5c0] sm:$0xff]
    %v269 = vld [vmem:[#allocation5 + $0x5c8] sm:$0xff]
    %v270 = vld [vmem:[#allocation5 + $0x5d0] sm:$0xff]
    %v271 = vld [vmem:[#allocation5 + $0x5d8] sm:$0xff]
    %v272 = vld [vmem:[#allocation5 + $0x5e0] sm:$0xff]
    %v273 = vld [vmem:[#allocation5 + $0x5e8] sm:$0xff]
    %v274 = vld [vmem:[#allocation5 + $0x5f0] sm:$0xff]
    %v275 = vld [vmem:[#allocation5 + $0x5f8] sm:$0xff]
    %v276 = vld [vmem:[#allocation5 + $0x600] sm:$0xff]
    %v277 = vld [vmem:[#allocation5 + $0x608] sm:$0xff]
    %v278 = vld [vmem:[#allocation5 + $0x610] sm:$0xff]
    %v279 = vld [vmem:[#allocation5 + $0x618] sm:$0xff]
    %v280 = vld [vmem:[#allocation5 + $0x620] sm:$0xff]
    %v281 = vld [vmem:[#allocation5 + $0x628] sm:$0xff]
    %v282 = vld [vmem:[#allocation5 + $0x630] sm:$0xff]
    %v283 = vld [vmem:[#allocation5 + $0x638] sm:$0xff]
    %v284 = vld [vmem:[#allocation5 + $0x640] sm:$0xff]
    %v285 = vld [vmem:[#allocation5 + $0x648] sm:$0xff]
    %v286 = vld [vmem:[#allocation5 + $0x650] sm:$0xff]
    %v287 = vld [vmem:[#allocation5 + $0x658] sm:$0xff]
    %v288 = vld [vmem:[#allocation5 + $0x660] sm:$0xff]
    %v289 = vld [vmem:[#allocation5 + $0x668] sm:$0xff]
    %v290 = vld [vmem:[#allocation5 + $0x670] sm:$0xff]
    %v291 = vld [vmem:[#allocation5 + $0x678] sm:$0xff]
    %v292 = vld [vmem:[#allocation5 + $0x680] sm:$0xff]
    %v293 = vld [vmem:[#allocation5 + $0x688] sm:$0xff]
    %v294 = vld [vmem:[#allocation5 + $0x690] sm:$0xff]
    %v295 = vld [vmem:[#allocation5 + $0x698] sm:$0xff]
    %v296 = vld [vmem:[#allocation5 + $0x6a0] sm:$0xff]
    %v297 = vld [vmem:[#allocation5 + $0x6a8] sm:$0xff]
    %v298 = vld [vmem:[#allocation5 + $0x6b0] sm:$0xff]
    %v299 = vld [vmem:[#allocation5 + $0x6b8] sm:$0xff]
    %v300 = vld [vmem:[#allocation5 + $0x6c0] sm:$0xff]
    %v301 = vld [vmem:[#allocation5 + $0x6c8] sm:$0xff]
    %v302 = vld [vmem:[#allocation5 + $0x6d0] sm:$0xff]
    %v303 = vld [vmem:[#allocation5 + $0x6d8] sm:$0xff]
    %v304 = vld [vmem:[#allocation5 + $0x6e0] sm:$0xff]
    %v305 = vld [vmem:[#allocation5 + $0x6e8] sm:$0xff]
    %v306 = vld [vmem:[#allocation5 + $0x6f0] sm:$0xff]
    %v307 = vld [vmem:[#allocation5 + $0x6f8] sm:$0xff]
    %v308 = vld [vmem:[#allocation5 + $0x700] sm:$0xff]
    %v309 = vld [vmem:[#allocation5 + $0x708] sm:$0xff]
    %v310 = vld [vmem:[#allocation5 + $0x710] sm:$0xff]
    %v311 = vld [vmem:[#allocation5 + $0x718] sm:$0xff]
    %v312 = vld [vmem:[#allocation5 + $0x720] sm:$0xff]
    %v313 = vld [vmem:[#allocation5 + $0x728] sm:$0xff]
    %v314 = vld [vmem:[#allocation5 + $0x730] sm:$0xff]
    %v315 = vld [vmem:[#allocation5 + $0x738] sm:$0xff]
    %v316 = vld [vmem:[#allocation5 + $0x740] sm:$0xff]
    %v317 = vld [vmem:[#allocation5 + $0x748] sm:$0xff]
    %v318 = vld [vmem:[#allocation5 + $0x750] sm:$0xff]
    %v319 = vld [vmem:[#allocation5 + $0x758] sm:$0xff]
    %v320 = vld [vmem:[#allocation5 + $0x760] sm:$0xff]
    %v321 = vld [vmem:[#allocation5 + $0x768] sm:$0xff]
    %v322 = vld [vmem:[#allocation5 + $0x770] sm:$0xff]
    %v323 = vld [vmem:[#allocation5 + $0x778] sm:$0xff]
    %v324 = vld [vmem:[#allocation5 + $0x780] sm:$0xff]
    %v325 = vld [vmem:[#allocation5 + $0x788] sm:$0xff]
    %v326 = vld [vmem:[#allocation5 + $0x790] sm:$0xff]
    %v327 = vld [vmem:[#allocation5 + $0x798] sm:$0xff]
    %v328 = vld [vmem:[#allocation5 + $0x7a0] sm:$0xff]
    %v329 = vld [vmem:[#allocation5 + $0x7a8] sm:$0xff]
    %v330 = vld [vmem:[#allocation5 + $0x7b0] sm:$0xff]
    %v331 = vld [vmem:[#allocation5 + $0x7b8] sm:$0xff]
    %v332 = vld [vmem:[#allocation5 + $0x7c0] sm:$0xff]
    %v333 = vld [vmem:[#allocation5 + $0x7c8] sm:$0xff]
    %v334 = vld [vmem:[#allocation5 + $0x7d0] sm:$0xff]
    %v335 = vld [vmem:[#allocation5 + $0x7d8] sm:$0xff]
    %v336 = vld [vmem:[#allocation5 + $0x7e0] sm:$0xff]
    %v337 = vld [vmem:[#allocation5 + $0x7e8] sm:$0xff]
    %v338 = vld [vmem:[#allocation5 + $0x7f0] sm:$0xff]
    %v339 = vld [vmem:[#allocation5 + $0x7f8] sm:$0xff]
    %v340 = vld [vmem:[#allocation7] sm:$0xf]
    %v342 = vperm.slane %v340, 0
    %v343 = vperm.slane %v340, 1
    %v344 = vperm.slane %v340, 2
    %v345 = vperm.slane %v340, 3
    %v606 = vunpack.c.l.b16 %v84
    %v607 = vunpack.c.h.b16 %v84
    %v608 = vunpack.c.l.b16 %v85
    %v609 = vunpack.c.h.b16 %v85
    %v610 = vunpack.c.l.b16 %v86
    %v611 = vunpack.c.h.b16 %v86
    %v612 = vunpack.c.l.b16 %v87
    %v613 = vunpack.c.h.b16 %v87
    %v614 = vunpack.c.l.b16 %v88
    %v615 = vunpack.c.h.b16 %v88
    %v616 = vunpack.c.l.b16 %v89
    %v617 = vunpack.c.h.b16 %v89
    %v618 = vunpack.c.l.b16 %v90
    %v619 = vunpack.c.h.b16 %v90
    %v620 = vunpack.c.l.b16 %v91
    %v621 = vunpack.c.h.b16 %v91
    %v622 = vunpack.c.l.b16 %v92
    %v623 = vunpack.c.h.b16 %v92
    %v624 = vunpack.c.l.b16 %v93
    %v625 = vunpack.c.h.b16 %v93
    %v626 = vunpack.c.l.b16 %v94
    %v627 = vunpack.c.h.b16 %v94
    %v628 = vunpack.c.l.b16 %v95
    %v629 = vunpack.c.h.b16 %v95
    %v630 = vunpack.c.l.b16 %v96
    %v631 = vunpack.c.h.b16 %v96
    %v632 = vunpack.c.l.b16 %v97
    %v633 = vunpack.c.h.b16 %v97
    %v634 = vunpack.c.l.b16 %v98
    %v635 = vunpack.c.h.b16 %v98
    %v636 = vunpack.c.l.b16 %v99
    %v637 = vunpack.c.h.b16 %v99
    %v638 = vunpack.c.l.b16 %v100
    %v639 = vunpack.c.h.b16 %v100
    %v640 = vunpack.c.l.b16 %v101
    %v641 = vunpack.c.h.b16 %v101
    %v642 = vunpack.c.l.b16 %v102
    %v643 = vunpack.c.h.b16 %v102
    %v644 = vunpack.c.l.b16 %v103
    %v645 = vunpack.c.h.b16 %v103
    %v646 = vunpack.c.l.b16 %v104
    %v647 = vunpack.c.h.b16 %v104
    %v648 = vunpack.c.l.b16 %v105
    %v649 = vunpack.c.h.b16 %v105
    %v650 = vunpack.c.l.b16 %v106
    %v651 = vunpack.c.h.b16 %v106
    %v652 = vunpack.c.l.b16 %v107
    %v653 = vunpack.c.h.b16 %v107
    %v654 = vunpack.c.l.b16 %v108
    %v655 = vunpack.c.h.b16 %v108
    %v656 = vunpack.c.l.b16 %v109
    %v657 = vunpack.c.h.b16 %v109
    %v658 = vunpack.c.l.b16 %v110
    %v659 = vunpack.c.h.b16 %v110
    %v660 = vunpack.c.l.b16 %v111
    %v661 = vunpack.c.h.b16 %v111
    %v662 = vunpack.c.l.b16 %v112
    %v663 = vunpack.c.h.b16 %v112
    %v664 = vunpack.c.l.b16 %v113
    %v665 = vunpack.c.h.b16 %v113
    %v666 = vunpack.c.l.b16 %v114
    %v667 = vunpack.c.h.b16 %v114
    %v668 = vunpack.c.l.b16 %v115
    %v669 = vunpack.c.h.b16 %v115
    %v670 = vunpack.c.l.b16 %v116
    %v671 = vunpack.c.h.b16 %v116
    %v672 = vunpack.c.l.b16 %v117
    %v673 = vunpack.c.h.b16 %v117
    %v674 = vunpack.c.l.b16 %v118
    %v675 = vunpack.c.h.b16 %v118
    %v676 = vunpack.c.l.b16 %v119
    %v677 = vunpack.c.h.b16 %v119
    %v678 = vunpack.c.l.b16 %v120
    %v679 = vunpack.c.h.b16 %v120
    %v680 = vunpack.c.l.b16 %v121
    %v681 = vunpack.c.h.b16 %v121
    %v682 = vunpack.c.l.b16 %v122
    %v683 = vunpack.c.h.b16 %v122
    %v684 = vunpack.c.l.b16 %v123
    %v685 = vunpack.c.h.b16 %v123
    %v686 = vunpack.c.l.b16 %v124
    %v687 = vunpack.c.h.b16 %v124
    %v688 = vunpack.c.l.b16 %v125
    %v689 = vunpack.c.h.b16 %v125
    %v690 = vunpack.c.l.b16 %v126
    %v691 = vunpack.c.h.b16 %v126
    %v692 = vunpack.c.l.b16 %v127
    %v693 = vunpack.c.h.b16 %v127
    %v694 = vunpack.c.l.b16 %v128
    %v695 = vunpack.c.h.b16 %v128
    %v696 = vunpack.c.l.b16 %v129
    %v697 = vunpack.c.h.b16 %v129
    %v698 = vunpack.c.l.b16 %v130
    %v699 = vunpack.c.h.b16 %v130
    %v700 = vunpack.c.l.b16 %v131
    %v701 = vunpack.c.h.b16 %v131
    %v702 = vunpack.c.l.b16 %v132
    %v703 = vunpack.c.h.b16 %v132
    %v704 = vunpack.c.l.b16 %v133
    %v705 = vunpack.c.h.b16 %v133
    %v706 = vunpack.c.l.b16 %v134
    %v707 = vunpack.c.h.b16 %v134
    %v708 = vunpack.c.l.b16 %v135
    %v709 = vunpack.c.h.b16 %v135
    %v710 = vunpack.c.l.b16 %v136
    %v711 = vunpack.c.h.b16 %v136
    %v712 = vunpack.c.l.b16 %v137
    %v713 = vunpack.c.h.b16 %v137
    %v714 = vunpack.c.l.b16 %v138
    %v715 = vunpack.c.h.b16 %v138
    %v716 = vunpack.c.l.b16 %v139
    %v717 = vunpack.c.h.b16 %v139
    %v718 = vunpack.c.l.b16 %v140
    %v719 = vunpack.c.h.b16 %v140
    %v720 = vunpack.c.l.b16 %v141
    %v721 = vunpack.c.h.b16 %v141
    %v722 = vunpack.c.l.b16 %v142
    %v723 = vunpack.c.h.b16 %v142
    %v724 = vunpack.c.l.b16 %v143
    %v725 = vunpack.c.h.b16 %v143
    %v726 = vunpack.c.l.b16 %v144
    %v727 = vunpack.c.h.b16 %v144
    %v728 = vunpack.c.l.b16 %v145
    %v729 = vunpack.c.h.b16 %v145
    %v730 = vunpack.c.l.b16 %v146
    %v731 = vunpack.c.h.b16 %v146
    %v732 = vunpack.c.l.b16 %v147
    %v733 = vunpack.c.h.b16 %v147
    %v734 = vunpack.c.l.b16 %v148
    %v735 = vunpack.c.h.b16 %v148
    %v736 = vunpack.c.l.b16 %v149
    %v737 = vunpack.c.h.b16 %v149
    %v738 = vunpack.c.l.b16 %v150
    %v739 = vunpack.c.h.b16 %v150
    %v740 = vunpack.c.l.b16 %v151
    %v741 = vunpack.c.h.b16 %v151
    %v742 = vunpack.c.l.b16 %v152
    %v743 = vunpack.c.h.b16 %v152
    %v744 = vunpack.c.l.b16 %v153
    %v745 = vunpack.c.h.b16 %v153
    %v746 = vunpack.c.l.b16 %v154
    %v747 = vunpack.c.h.b16 %v154
    %v748 = vunpack.c.l.b16 %v155
    %v749 = vunpack.c.h.b16 %v155
    %v750 = vunpack.c.l.b16 %v156
    %v751 = vunpack.c.h.b16 %v156
    %v752 = vunpack.c.l.b16 %v157
    %v753 = vunpack.c.h.b16 %v157
    %v754 = vunpack.c.l.b16 %v158
    %v755 = vunpack.c.h.b16 %v158
    %v756 = vunpack.c.l.b16 %v159
    %v757 = vunpack.c.h.b16 %v159
    %v758 = vunpack.c.l.b16 %v160
    %v759 = vunpack.c.h.b16 %v160
    %v760 = vunpack.c.l.b16 %v161
    %v761 = vunpack.c.h.b16 %v161
    %v762 = vunpack.c.l.b16 %v162
    %v763 = vunpack.c.h.b16 %v162
    %v764 = vunpack.c.l.b16 %v163
    %v765 = vunpack.c.h.b16 %v163
    %v766 = vunpack.c.l.b16 %v164
    %v767 = vunpack.c.h.b16 %v164
    %v768 = vunpack.c.l.b16 %v165
    %v769 = vunpack.c.h.b16 %v165
    %v770 = vunpack.c.l.b16 %v166
    %v771 = vunpack.c.h.b16 %v166
    %v772 = vunpack.c.l.b16 %v167
    %v773 = vunpack.c.h.b16 %v167
    %v774 = vunpack.c.l.b16 %v168
    %v775 = vunpack.c.h.b16 %v168
    %v776 = vunpack.c.l.b16 %v169
    %v777 = vunpack.c.h.b16 %v169
    %v778 = vunpack.c.l.b16 %v170
    %v779 = vunpack.c.h.b16 %v170
    %v780 = vunpack.c.l.b16 %v171
    %v781 = vunpack.c.h.b16 %v171
    %v782 = vunpack.c.l.b16 %v172
    %v783 = vunpack.c.h.b16 %v172
    %v784 = vunpack.c.l.b16 %v173
    %v785 = vunpack.c.h.b16 %v173
    %v786 = vunpack.c.l.b16 %v174
    %v787 = vunpack.c.h.b16 %v174
    %v788 = vunpack.c.l.b16 %v175
    %v789 = vunpack.c.h.b16 %v175
    %v790 = vunpack.c.l.b16 %v176
    %v791 = vunpack.c.h.b16 %v176
    %v792 = vunpack.c.l.b16 %v177
    %v793 = vunpack.c.h.b16 %v177
    %v794 = vunpack.c.l.b16 %v178
    %v795 = vunpack.c.h.b16 %v178
    %v796 = vunpack.c.l.b16 %v179
    %v797 = vunpack.c.h.b16 %v179
    %v798 = vunpack.c.l.b16 %v180
    %v799 = vunpack.c.h.b16 %v180
    %v800 = vunpack.c.l.b16 %v181
    %v801 = vunpack.c.h.b16 %v181
    %v802 = vunpack.c.l.b16 %v182
    %v803 = vunpack.c.h.b16 %v182
    %v804 = vunpack.c.l.b16 %v183
    %v805 = vunpack.c.h.b16 %v183
    %v806 = vunpack.c.l.b16 %v184
    %v807 = vunpack.c.h.b16 %v184
    %v808 = vunpack.c.l.b16 %v185
    %v809 = vunpack.c.h.b16 %v185
    %v810 = vunpack.c.l.b16 %v186
    %v811 = vunpack.c.h.b16 %v186
    %v812 = vunpack.c.l.b16 %v187
    %v813 = vunpack.c.h.b16 %v187
    %v814 = vunpack.c.l.b16 %v188
    %v815 = vunpack.c.h.b16 %v188
    %v816 = vunpack.c.l.b16 %v189
    %v817 = vunpack.c.h.b16 %v189
    %v818 = vunpack.c.l.b16 %v190
    %v819 = vunpack.c.h.b16 %v190
    %v820 = vunpack.c.l.b16 %v191
    %v821 = vunpack.c.h.b16 %v191
    %v822 = vunpack.c.l.b16 %v192
    %v823 = vunpack.c.h.b16 %v192
    %v824 = vunpack.c.l.b16 %v193
    %v825 = vunpack.c.h.b16 %v193
    %v826 = vunpack.c.l.b16 %v194
    %v827 = vunpack.c.h.b16 %v194
    %v828 = vunpack.c.l.b16 %v195
    %v829 = vunpack.c.h.b16 %v195
    %v830 = vunpack.c.l.b16 %v196
    %v831 = vunpack.c.h.b16 %v196
    %v832 = vunpack.c.l.b16 %v197
    %v833 = vunpack.c.h.b16 %v197
    %v834 = vunpack.c.l.b16 %v198
    %v835 = vunpack.c.h.b16 %v198
    %v836 = vunpack.c.l.b16 %v199
    %v837 = vunpack.c.h.b16 %v199
    %v838 = vunpack.c.l.b16 %v200
    %v839 = vunpack.c.h.b16 %v200
    %v840 = vunpack.c.l.b16 %v201
    %v841 = vunpack.c.h.b16 %v201
    %v842 = vunpack.c.l.b16 %v202
    %v843 = vunpack.c.h.b16 %v202
    %v844 = vunpack.c.l.b16 %v203
    %v845 = vunpack.c.h.b16 %v203
    %v846 = vunpack.c.l.b16 %v204
    %v847 = vunpack.c.h.b16 %v204
    %v848 = vunpack.c.l.b16 %v205
    %v849 = vunpack.c.h.b16 %v205
    %v850 = vunpack.c.l.b16 %v206
    %v851 = vunpack.c.h.b16 %v206
    %v852 = vunpack.c.l.b16 %v207
    %v853 = vunpack.c.h.b16 %v207
    %v854 = vunpack.c.l.b16 %v208
    %v855 = vunpack.c.h.b16 %v208
    %v856 = vunpack.c.l.b16 %v209
    %v857 = vunpack.c.h.b16 %v209
    %v858 = vunpack.c.l.b16 %v210
    %v859 = vunpack.c.h.b16 %v210
    %v860 = vunpack.c.l.b16 %v211
    %v861 = vunpack.c.h.b16 %v211
    %v862 = vunpack.c.l.b16 %v212
    %v863 = vunpack.c.h.b16 %v212
    %v864 = vunpack.c.l.b16 %v213
    %v865 = vunpack.c.h.b16 %v213
    %v866 = vunpack.c.l.b16 %v214
    %v867 = vunpack.c.h.b16 %v214
    %v868 = vunpack.c.l.b16 %v215
    %v869 = vunpack.c.h.b16 %v215
    %v870 = vunpack.c.l.b16 %v216
    %v871 = vunpack.c.h.b16 %v216
    %v872 = vunpack.c.l.b16 %v217
    %v873 = vunpack.c.h.b16 %v217
    %v874 = vunpack.c.l.b16 %v218
    %v875 = vunpack.c.h.b16 %v218
    %v876 = vunpack.c.l.b16 %v219
    %v877 = vunpack.c.h.b16 %v219
    %v878 = vunpack.c.l.b16 %v220
    %v879 = vunpack.c.h.b16 %v220
    %v880 = vunpack.c.l.b16 %v221
    %v881 = vunpack.c.h.b16 %v221
    %v882 = vunpack.c.l.b16 %v222
    %v883 = vunpack.c.h.b16 %v222
    %v884 = vunpack.c.l.b16 %v223
    %v885 = vunpack.c.h.b16 %v223
    %v886 = vunpack.c.l.b16 %v224
    %v887 = vunpack.c.h.b16 %v224
    %v888 = vunpack.c.l.b16 %v225
    %v889 = vunpack.c.h.b16 %v225
    %v890 = vunpack.c.l.b16 %v226
    %v891 = vunpack.c.h.b16 %v226
    %v892 = vunpack.c.l.b16 %v227
    %v893 = vunpack.c.h.b16 %v227
    %v894 = vunpack.c.l.b16 %v228
    %v895 = vunpack.c.h.b16 %v228
    %v896 = vunpack.c.l.b16 %v229
    %v897 = vunpack.c.h.b16 %v229
    %v898 = vunpack.c.l.b16 %v230
    %v899 = vunpack.c.h.b16 %v230
    %v900 = vunpack.c.l.b16 %v231
    %v901 = vunpack.c.h.b16 %v231
    %v902 = vunpack.c.l.b16 %v232
    %v903 = vunpack.c.h.b16 %v232
    %v904 = vunpack.c.l.b16 %v233
    %v905 = vunpack.c.h.b16 %v233
    %v906 = vunpack.c.l.b16 %v234
    %v907 = vunpack.c.h.b16 %v234
    %v908 = vunpack.c.l.b16 %v235
    %v909 = vunpack.c.h.b16 %v235
    %v910 = vunpack.c.l.b16 %v236
    %v911 = vunpack.c.h.b16 %v236
    %v912 = vunpack.c.l.b16 %v237
    %v913 = vunpack.c.h.b16 %v237
    %v914 = vunpack.c.l.b16 %v238
    %v915 = vunpack.c.h.b16 %v238
    %v916 = vunpack.c.l.b16 %v239
    %v917 = vunpack.c.h.b16 %v239
    %v918 = vunpack.c.l.b16 %v240
    %v919 = vunpack.c.h.b16 %v240
    %v920 = vunpack.c.l.b16 %v241
    %v921 = vunpack.c.h.b16 %v241
    %v922 = vunpack.c.l.b16 %v242
    %v923 = vunpack.c.h.b16 %v242
    %v924 = vunpack.c.l.b16 %v243
    %v925 = vunpack.c.h.b16 %v243
    %v926 = vunpack.c.l.b16 %v244
    %v927 = vunpack.c.h.b16 %v244
    %v928 = vunpack.c.l.b16 %v245
    %v929 = vunpack.c.h.b16 %v245
    %v930 = vunpack.c.l.b16 %v246
    %v931 = vunpack.c.h.b16 %v246
    %v932 = vunpack.c.l.b16 %v247
    %v933 = vunpack.c.h.b16 %v247
    %v934 = vunpack.c.l.b16 %v248
    %v935 = vunpack.c.h.b16 %v248
    %v936 = vunpack.c.l.b16 %v249
    %v937 = vunpack.c.h.b16 %v249
    %v938 = vunpack.c.l.b16 %v250
    %v939 = vunpack.c.h.b16 %v250
    %v940 = vunpack.c.l.b16 %v251
    %v941 = vunpack.c.h.b16 %v251
    %v942 = vunpack.c.l.b16 %v252
    %v943 = vunpack.c.h.b16 %v252
    %v944 = vunpack.c.l.b16 %v253
    %v945 = vunpack.c.h.b16 %v253
    %v946 = vunpack.c.l.b16 %v254
    %v947 = vunpack.c.h.b16 %v254
    %v948 = vunpack.c.l.b16 %v255
    %v949 = vunpack.c.h.b16 %v255
    %v950 = vunpack.c.l.b16 %v256
    %v951 = vunpack.c.h.b16 %v256
    %v952 = vunpack.c.l.b16 %v257
    %v953 = vunpack.c.h.b16 %v257
    %v954 = vunpack.c.l.b16 %v258
    %v955 = vunpack.c.h.b16 %v258
    %v956 = vunpack.c.l.b16 %v259
    %v957 = vunpack.c.h.b16 %v259
    %v958 = vunpack.c.l.b16 %v260
    %v959 = vunpack.c.h.b16 %v260
    %v960 = vunpack.c.l.b16 %v261
    %v961 = vunpack.c.h.b16 %v261
    %v962 = vunpack.c.l.b16 %v262
    %v963 = vunpack.c.h.b16 %v262
    %v964 = vunpack.c.l.b16 %v263
    %v965 = vunpack.c.h.b16 %v263
    %v966 = vunpack.c.l.b16 %v264
    %v967 = vunpack.c.h.b16 %v264
    %v968 = vunpack.c.l.b16 %v265
    %v969 = vunpack.c.h.b16 %v265
    %v970 = vunpack.c.l.b16 %v266
    %v971 = vunpack.c.h.b16 %v266
    %v972 = vunpack.c.l.b16 %v267
    %v973 = vunpack.c.h.b16 %v267
    %v974 = vunpack.c.l.b16 %v268
    %v975 = vunpack.c.h.b16 %v268
    %v976 = vunpack.c.l.b16 %v269
    %v977 = vunpack.c.h.b16 %v269
    %v978 = vunpack.c.l.b16 %v270
    %v979 = vunpack.c.h.b16 %v270
    %v980 = vunpack.c.l.b16 %v271
    %v981 = vunpack.c.h.b16 %v271
    %v982 = vunpack.c.l.b16 %v272
    %v983 = vunpack.c.h.b16 %v272
    %v984 = vunpack.c.l.b16 %v273
    %v985 = vunpack.c.h.b16 %v273
    %v986 = vunpack.c.l.b16 %v274
    %v987 = vunpack.c.h.b16 %v274
    %v988 = vunpack.c.l.b16 %v275
    %v989 = vunpack.c.h.b16 %v275
    %v990 = vunpack.c.l.b16 %v276
    %v991 = vunpack.c.h.b16 %v276
    %v992 = vunpack.c.l.b16 %v277
    %v993 = vunpack.c.h.b16 %v277
    %v994 = vunpack.c.l.b16 %v278
    %v995 = vunpack.c.h.b16 %v278
    %v996 = vunpack.c.l.b16 %v279
    %v997 = vunpack.c.h.b16 %v279
    %v998 = vunpack.c.l.b16 %v280
    %v999 = vunpack.c.h.b16 %v280
    %v1000 = vunpack.c.l.b16 %v281
    %v1001 = vunpack.c.h.b16 %v281
    %v1002 = vunpack.c.l.b16 %v282
    %v1003 = vunpack.c.h.b16 %v282
    %v1004 = vunpack.c.l.b16 %v283
    %v1005 = vunpack.c.h.b16 %v283
    %v1006 = vunpack.c.l.b16 %v284
    %v1007 = vunpack.c.h.b16 %v284
    %v1008 = vunpack.c.l.b16 %v285
    %v1009 = vunpack.c.h.b16 %v285
    %v1010 = vunpack.c.l.b16 %v286
    %v1011 = vunpack.c.h.b16 %v286
    %v1012 = vunpack.c.l.b16 %v287
    %v1013 = vunpack.c.h.b16 %v287
    %v1014 = vunpack.c.l.b16 %v288
    %v1015 = vunpack.c.h.b16 %v288
    %v1016 = vunpack.c.l.b16 %v289
    %v1017 = vunpack.c.h.b16 %v289
    %v1018 = vunpack.c.l.b16 %v290
    %v1019 = vunpack.c.h.b16 %v290
    %v1020 = vunpack.c.l.b16 %v291
    %v1021 = vunpack.c.h.b16 %v291
    %v1022 = vunpack.c.l.b16 %v292
    %v1023 = vunpack.c.h.b16 %v292
    %v1024 = vunpack.c.l.b16 %v293
    %v1025 = vunpack.c.h.b16 %v293
    %v1026 = vunpack.c.l.b16 %v294
    %v1027 = vunpack.c.h.b16 %v294
    %v1028 = vunpack.c.l.b16 %v295
    %v1029 = vunpack.c.h.b16 %v295
    %v1030 = vunpack.c.l.b16 %v296
    %v1031 = vunpack.c.h.b16 %v296
    %v1032 = vunpack.c.l.b16 %v297
    %v1033 = vunpack.c.h.b16 %v297
    %v1034 = vunpack.c.l.b16 %v298
    %v1035 = vunpack.c.h.b16 %v298
    %v1036 = vunpack.c.l.b16 %v299
    %v1037 = vunpack.c.h.b16 %v299
    %v1038 = vunpack.c.l.b16 %v300
    %v1039 = vunpack.c.h.b16 %v300
    %v1040 = vunpack.c.l.b16 %v301
    %v1041 = vunpack.c.h.b16 %v301
    %v1042 = vunpack.c.l.b16 %v302
    %v1043 = vunpack.c.h.b16 %v302
    %v1044 = vunpack.c.l.b16 %v303
    %v1045 = vunpack.c.h.b16 %v303
    %v1046 = vunpack.c.l.b16 %v304
    %v1047 = vunpack.c.h.b16 %v304
    %v1048 = vunpack.c.l.b16 %v305
    %v1049 = vunpack.c.h.b16 %v305
    %v1050 = vunpack.c.l.b16 %v306
    %v1051 = vunpack.c.h.b16 %v306
    %v1052 = vunpack.c.l.b16 %v307
    %v1053 = vunpack.c.h.b16 %v307
    %v1054 = vunpack.c.l.b16 %v308
    %v1055 = vunpack.c.h.b16 %v308
    %v1056 = vunpack.c.l.b16 %v309
    %v1057 = vunpack.c.h.b16 %v309
    %v1058 = vunpack.c.l.b16 %v310
    %v1059 = vunpack.c.h.b16 %v310
    %v1060 = vunpack.c.l.b16 %v311
    %v1061 = vunpack.c.h.b16 %v311
    %v1062 = vunpack.c.l.b16 %v312
    %v1063 = vunpack.c.h.b16 %v312
    %v1064 = vunpack.c.l.b16 %v313
    %v1065 = vunpack.c.h.b16 %v313
    %v1066 = vunpack.c.l.b16 %v314
    %v1067 = vunpack.c.h.b16 %v314
    %v1068 = vunpack.c.l.b16 %v315
    %v1069 = vunpack.c.h.b16 %v315
    %v1070 = vunpack.c.l.b16 %v316
    %v1071 = vunpack.c.h.b16 %v316
    %v1072 = vunpack.c.l.b16 %v317
    %v1073 = vunpack.c.h.b16 %v317
    %v1074 = vunpack.c.l.b16 %v318
    %v1075 = vunpack.c.h.b16 %v318
    %v1076 = vunpack.c.l.b16 %v319
    %v1077 = vunpack.c.h.b16 %v319
    %v1078 = vunpack.c.l.b16 %v320
    %v1079 = vunpack.c.h.b16 %v320
    %v1080 = vunpack.c.l.b16 %v321
    %v1081 = vunpack.c.h.b16 %v321
    %v1082 = vunpack.c.l.b16 %v322
    %v1083 = vunpack.c.h.b16 %v322
    %v1084 = vunpack.c.l.b16 %v323
    %v1085 = vunpack.c.h.b16 %v323
    %v1086 = vunpack.c.l.b16 %v324
    %v1087 = vunpack.c.h.b16 %v324
    %v1088 = vunpack.c.l.b16 %v325
    %v1089 = vunpack.c.h.b16 %v325
    %v1090 = vunpack.c.l.b16 %v326
    %v1091 = vunpack.c.h.b16 %v326
    %v1092 = vunpack.c.l.b16 %v327
    %v1093 = vunpack.c.h.b16 %v327
    %v1094 = vunpack.c.l.b16 %v328
    %v1095 = vunpack.c.h.b16 %v328
    %v1096 = vunpack.c.l.b16 %v329
    %v1097 = vunpack.c.h.b16 %v329
    %v1098 = vunpack.c.l.b16 %v330
    %v1099 = vunpack.c.h.b16 %v330
    %v1100 = vunpack.c.l.b16 %v331
    %v1101 = vunpack.c.h.b16 %v331
    %v1102 = vunpack.c.l.b16 %v332
    %v1103 = vunpack.c.h.b16 %v332
    %v1104 = vunpack.c.l.b16 %v333
    %v1105 = vunpack.c.h.b16 %v333
    %v1106 = vunpack.c.l.b16 %v334
    %v1107 = vunpack.c.h.b16 %v334
    %v1108 = vunpack.c.l.b16 %v335
    %v1109 = vunpack.c.h.b16 %v335
    %v1110 = vunpack.c.l.b16 %v336
    %v1111 = vunpack.c.h.b16 %v336
    %v1112 = vunpack.c.l.b16 %v337
    %v1113 = vunpack.c.h.b16 %v337
    %v1114 = vunpack.c.l.b16 %v338
    %v1115 = vunpack.c.h.b16 %v338
    %v1116 = vunpack.c.l.b16 %v339
    %v1117 = vunpack.c.h.b16 %v339
    %v1118 = vpack.c.b16 %v610, %v606
    %v1119 = vpack.c.b16 %v611, %v607
    %v1120 = vpack.c.b16 %v612, %v608
    %v1121 = vpack.c.b16 %v613, %v609
    %v1122 = vpack.c.b16 %v618, %v614
    %v1123 = vpack.c.b16 %v619, %v615
    %v1124 = vpack.c.b16 %v620, %v616
    %v1125 = vpack.c.b16 %v621, %v617
    %v1126 = vpack.c.b16 %v626, %v622
    %v1127 = vpack.c.b16 %v627, %v623
    %v1128 = vpack.c.b16 %v628, %v624
    %v1129 = vpack.c.b16 %v629, %v625
    %v1130 = vpack.c.b16 %v634, %v630
    %v1131 = vpack.c.b16 %v635, %v631
    %v1132 = vpack.c.b16 %v636, %v632
    %v1133 = vpack.c.b16 %v637, %v633
    %v1134 = vpack.c.b16 %v642, %v638
    %v1135 = vpack.c.b16 %v643, %v639
    %v1136 = vpack.c.b16 %v644, %v640
    %v1137 = vpack.c.b16 %v645, %v641
    %v1138 = vpack.c.b16 %v650, %v646
    %v1139 = vpack.c.b16 %v651, %v647
    %v1140 = vpack.c.b16 %v652, %v648
    %v1141 = vpack.c.b16 %v653, %v649
    %v1142 = vpack.c.b16 %v658, %v654
    %v1143 = vpack.c.b16 %v659, %v655
    %v1144 = vpack.c.b16 %v660, %v656
    %v1145 = vpack.c.b16 %v661, %v657
    %v1146 = vpack.c.b16 %v666, %v662
    %v1147 = vpack.c.b16 %v667, %v663
    %v1148 = vpack.c.b16 %v668, %v664
    %v1149 = vpack.c.b16 %v669, %v665
    %v1150 = vpack.c.b16 %v674, %v670
    %v1151 = vpack.c.b16 %v675, %v671
    %v1152 = vpack.c.b16 %v676, %v672
    %v1153 = vpack.c.b16 %v677, %v673
    %v1154 = vpack.c.b16 %v682, %v678
    %v1155 = vpack.c.b16 %v683, %v679
    %v1156 = vpack.c.b16 %v684, %v680
    %v1157 = vpack.c.b16 %v685, %v681
    %v1158 = vpack.c.b16 %v690, %v686
    %v1159 = vpack.c.b16 %v691, %v687
    %v1160 = vpack.c.b16 %v692, %v688
    %v1161 = vpack.c.b16 %v693, %v689
    %v1162 = vpack.c.b16 %v698, %v694
    %v1163 = vpack.c.b16 %v699, %v695
    %v1164 = vpack.c.b16 %v700, %v696
    %v1165 = vpack.c.b16 %v701, %v697
    %v1166 = vpack.c.b16 %v706, %v702
    %v1167 = vpack.c.b16 %v707, %v703
    %v1168 = vpack.c.b16 %v708, %v704
    %v1169 = vpack.c.b16 %v709, %v705
    %v1170 = vpack.c.b16 %v714, %v710
    %v1171 = vpack.c.b16 %v715, %v711
    %v1172 = vpack.c.b16 %v716, %v712
    %v1173 = vpack.c.b16 %v717, %v713
    %v1174 = vpack.c.b16 %v722, %v718
    %v1175 = vpack.c.b16 %v723, %v719
    %v1176 = vpack.c.b16 %v724, %v720
    %v1177 = vpack.c.b16 %v725, %v721
    %v1178 = vpack.c.b16 %v730, %v726
    %v1179 = vpack.c.b16 %v731, %v727
    %v1180 = vpack.c.b16 %v732, %v728
    %v1181 = vpack.c.b16 %v733, %v729
    %v1182 = vpack.c.b16 %v738, %v734
    %v1183 = vpack.c.b16 %v739, %v735
    %v1184 = vpack.c.b16 %v740, %v736
    %v1185 = vpack.c.b16 %v741, %v737
    %v1186 = vpack.c.b16 %v746, %v742
    %v1187 = vpack.c.b16 %v747, %v743
    %v1188 = vpack.c.b16 %v748, %v744
    %v1189 = vpack.c.b16 %v749, %v745
    %v1190 = vpack.c.b16 %v754, %v750
    %v1191 = vpack.c.b16 %v755, %v751
    %v1192 = vpack.c.b16 %v756, %v752
    %v1193 = vpack.c.b16 %v757, %v753
    %v1194 = vpack.c.b16 %v762, %v758
    %v1195 = vpack.c.b16 %v763, %v759
    %v1196 = vpack.c.b16 %v764, %v760
    %v1197 = vpack.c.b16 %v765, %v761
    %v1198 = vpack.c.b16 %v770, %v766
    %v1199 = vpack.c.b16 %v771, %v767
    %v1200 = vpack.c.b16 %v772, %v768
    %v1201 = vpack.c.b16 %v773, %v769
    %v1202 = vpack.c.b16 %v778, %v774
    %v1203 = vpack.c.b16 %v779, %v775
    %v1204 = vpack.c.b16 %v780, %v776
    %v1205 = vpack.c.b16 %v781, %v777
    %v1206 = vpack.c.b16 %v786, %v782
    %v1207 = vpack.c.b16 %v787, %v783
    %v1208 = vpack.c.b16 %v788, %v784
    %v1209 = vpack.c.b16 %v789, %v785
    %v1210 = vpack.c.b16 %v794, %v790
    %v1211 = vpack.c.b16 %v795, %v791
    %v1212 = vpack.c.b16 %v796, %v792
    %v1213 = vpack.c.b16 %v797, %v793
    %v1214 = vpack.c.b16 %v802, %v798
    %v1215 = vpack.c.b16 %v803, %v799
    %v1216 = vpack.c.b16 %v804, %v800
    %v1217 = vpack.c.b16 %v805, %v801
    %v1218 = vpack.c.b16 %v810, %v806
    %v1219 = vpack.c.b16 %v811, %v807
    %v1220 = vpack.c.b16 %v812, %v808
    %v1221 = vpack.c.b16 %v813, %v809
    %v1222 = vpack.c.b16 %v818, %v814
    %v1223 = vpack.c.b16 %v819, %v815
    %v1224 = vpack.c.b16 %v820, %v816
    %v1225 = vpack.c.b16 %v821, %v817
    %v1226 = vpack.c.b16 %v826, %v822
    %v1227 = vpack.c.b16 %v827, %v823
    %v1228 = vpack.c.b16 %v828, %v824
    %v1229 = vpack.c.b16 %v829, %v825
    %v1230 = vpack.c.b16 %v834, %v830
    %v1231 = vpack.c.b16 %v835, %v831
    %v1232 = vpack.c.b16 %v836, %v832
    %v1233 = vpack.c.b16 %v837, %v833
    %v1234 = vpack.c.b16 %v842, %v838
    %v1235 = vpack.c.b16 %v843, %v839
    %v1236 = vpack.c.b16 %v844, %v840
    %v1237 = vpack.c.b16 %v845, %v841
    %v1238 = vpack.c.b16 %v850, %v846
    %v1239 = vpack.c.b16 %v851, %v847
    %v1240 = vpack.c.b16 %v852, %v848
    %v1241 = vpack.c.b16 %v853, %v849
    %v1242 = vpack.c.b16 %v858, %v854
    %v1243 = vpack.c.b16 %v859, %v855
    %v1244 = vpack.c.b16 %v860, %v856
    %v1245 = vpack.c.b16 %v861, %v857
    %v1246 = vpack.c.b16 %v866, %v862
    %v1247 = vpack.c.b16 %v867, %v863
    %v1248 = vpack.c.b16 %v868, %v864
    %v1249 = vpack.c.b16 %v869, %v865
    %v1250 = vpack.c.b16 %v874, %v870
    %v1251 = vpack.c.b16 %v875, %v871
    %v1252 = vpack.c.b16 %v876, %v872
    %v1253 = vpack.c.b16 %v877, %v873
    %v1254 = vpack.c.b16 %v882, %v878
    %v1255 = vpack.c.b16 %v883, %v879
    %v1256 = vpack.c.b16 %v884, %v880
    %v1257 = vpack.c.b16 %v885, %v881
    %v1258 = vpack.c.b16 %v890, %v886
    %v1259 = vpack.c.b16 %v891, %v887
    %v1260 = vpack.c.b16 %v892, %v888
    %v1261 = vpack.c.b16 %v893, %v889
    %v1262 = vpack.c.b16 %v898, %v894
    %v1263 = vpack.c.b16 %v899, %v895
    %v1264 = vpack.c.b16 %v900, %v896
    %v1265 = vpack.c.b16 %v901, %v897
    %v1266 = vpack.c.b16 %v906, %v902
    %v1267 = vpack.c.b16 %v907, %v903
    %v1268 = vpack.c.b16 %v908, %v904
    %v1269 = vpack.c.b16 %v909, %v905
    %v1270 = vpack.c.b16 %v914, %v910
    %v1271 = vpack.c.b16 %v915, %v911
    %v1272 = vpack.c.b16 %v916, %v912
    %v1273 = vpack.c.b16 %v917, %v913
    %v1274 = vpack.c.b16 %v922, %v918
    %v1275 = vpack.c.b16 %v923, %v919
    %v1276 = vpack.c.b16 %v924, %v920
    %v1277 = vpack.c.b16 %v925, %v921
    %v1278 = vpack.c.b16 %v930, %v926
    %v1279 = vpack.c.b16 %v931, %v927
    %v1280 = vpack.c.b16 %v932, %v928
    %v1281 = vpack.c.b16 %v933, %v929
    %v1282 = vpack.c.b16 %v938, %v934
    %v1283 = vpack.c.b16 %v939, %v935
    %v1284 = vpack.c.b16 %v940, %v936
    %v1285 = vpack.c.b16 %v941, %v937
    %v1286 = vpack.c.b16 %v946, %v942
    %v1287 = vpack.c.b16 %v947, %v943
    %v1288 = vpack.c.b16 %v948, %v944
    %v1289 = vpack.c.b16 %v949, %v945
    %v1290 = vpack.c.b16 %v954, %v950
    %v1291 = vpack.c.b16 %v955, %v951
    %v1292 = vpack.c.b16 %v956, %v952
    %v1293 = vpack.c.b16 %v957, %v953
    %v1294 = vpack.c.b16 %v962, %v958
    %v1295 = vpack.c.b16 %v963, %v959
    %v1296 = vpack.c.b16 %v964, %v960
    %v1297 = vpack.c.b16 %v965, %v961
    %v1298 = vpack.c.b16 %v970, %v966
    %v1299 = vpack.c.b16 %v971, %v967
    %v1300 = vpack.c.b16 %v972, %v968
    %v1301 = vpack.c.b16 %v973, %v969
    %v1302 = vpack.c.b16 %v978, %v974
    %v1303 = vpack.c.b16 %v979, %v975
    %v1304 = vpack.c.b16 %v980, %v976
    %v1305 = vpack.c.b16 %v981, %v977
    %v1306 = vpack.c.b16 %v986, %v982
    %v1307 = vpack.c.b16 %v987, %v983
    %v1308 = vpack.c.b16 %v988, %v984
    %v1309 = vpack.c.b16 %v989, %v985
    %v1310 = vpack.c.b16 %v994, %v990
    %v1311 = vpack.c.b16 %v995, %v991
    %v1312 = vpack.c.b16 %v996, %v992
    %v1313 = vpack.c.b16 %v997, %v993
    %v1314 = vpack.c.b16 %v1002, %v998
    %v1315 = vpack.c.b16 %v1003, %v999
    %v1316 = vpack.c.b16 %v1004, %v1000
    %v1317 = vpack.c.b16 %v1005, %v1001
    %v1318 = vpack.c.b16 %v1010, %v1006
    %v1319 = vpack.c.b16 %v1011, %v1007
    %v1320 = vpack.c.b16 %v1012, %v1008
    %v1321 = vpack.c.b16 %v1013, %v1009
    %v1322 = vpack.c.b16 %v1018, %v1014
    %v1323 = vpack.c.b16 %v1019, %v1015
    %v1324 = vpack.c.b16 %v1020, %v1016
    %v1325 = vpack.c.b16 %v1021, %v1017
    %v1326 = vpack.c.b16 %v1026, %v1022
    %v1327 = vpack.c.b16 %v1027, %v1023
    %v1328 = vpack.c.b16 %v1028, %v1024
    %v1329 = vpack.c.b16 %v1029, %v1025
    %v1330 = vpack.c.b16 %v1034, %v1030
    %v1331 = vpack.c.b16 %v1035, %v1031
    %v1332 = vpack.c.b16 %v1036, %v1032
    %v1333 = vpack.c.b16 %v1037, %v1033
    %v1334 = vpack.c.b16 %v1042, %v1038
    %v1335 = vpack.c.b16 %v1043, %v1039
    %v1336 = vpack.c.b16 %v1044, %v1040
    %v1337 = vpack.c.b16 %v1045, %v1041
    %v1338 = vpack.c.b16 %v1050, %v1046
    %v1339 = vpack.c.b16 %v1051, %v1047
    %v1340 = vpack.c.b16 %v1052, %v1048
    %v1341 = vpack.c.b16 %v1053, %v1049
    %v1342 = vpack.c.b16 %v1058, %v1054
    %v1343 = vpack.c.b16 %v1059, %v1055
    %v1344 = vpack.c.b16 %v1060, %v1056
    %v1345 = vpack.c.b16 %v1061, %v1057
    %v1346 = vpack.c.b16 %v1066, %v1062
    %v1347 = vpack.c.b16 %v1067, %v1063
    %v1348 = vpack.c.b16 %v1068, %v1064
    %v1349 = vpack.c.b16 %v1069, %v1065
    %v1350 = vpack.c.b16 %v1074, %v1070
    %v1351 = vpack.c.b16 %v1075, %v1071
    %v1352 = vpack.c.b16 %v1076, %v1072
    %v1353 = vpack.c.b16 %v1077, %v1073
    %v1354 = vpack.c.b16 %v1082, %v1078
    %v1355 = vpack.c.b16 %v1083, %v1079
    %v1356 = vpack.c.b16 %v1084, %v1080
    %v1357 = vpack.c.b16 %v1085, %v1081
    %v1358 = vpack.c.b16 %v1090, %v1086
    %v1359 = vpack.c.b16 %v1091, %v1087
    %v1360 = vpack.c.b16 %v1092, %v1088
    %v1361 = vpack.c.b16 %v1093, %v1089
    %v1362 = vpack.c.b16 %v1098, %v1094
    %v1363 = vpack.c.b16 %v1099, %v1095
    %v1364 = vpack.c.b16 %v1100, %v1096
    %v1365 = vpack.c.b16 %v1101, %v1097
    %v1366 = vpack.c.b16 %v1106, %v1102
    %v1367 = vpack.c.b16 %v1107, %v1103
    %v1368 = vpack.c.b16 %v1108, %v1104
    %v1369 = vpack.c.b16 %v1109, %v1105
    %v1370 = vpack.c.b16 %v1114, %v1110
    %v1371 = vpack.c.b16 %v1115, %v1111
    %v1372 = vpack.c.b16 %v1116, %v1112
    %v1373 = vpack.c.b16 %v1117, %v1113
    %1630 = vmatpush.bf16.msra.mxu0 %v1146
    %1631 = vmatpush.bf16.msra.mxu0 %v1142
    %1632 = vmatpush.bf16.msra.mxu0 %v1138
    %1633 = vmatpush.bf16.msra.mxu0 %v1134
    %1634 = vmatpush.bf16.msra.mxu0 %v1130
    %1635 = vmatpush.bf16.msra.mxu0 %v1126
    %1636 = vmatpush.bf16.msra.mxu0 %v1122
    %1637 = vmatpush.bf16.msra.mxu0 %v1118
    %1638 = vmatmul.bf16.gmra.mxu0 %v76
    %v1639 = vpop.f32.mrf.mxu0
    %v1640 = vadd.f32 %v342, %v1639
    %v1641 = vpop.f32.mrf.mxu0
    %v1642 = vadd.f32 %v342, %v1641
    %1643 = vdwg.mxu0
    %1644 = vmatpush.bf16.msra.mxu0 %v1178
    %1645 = vmatpush.bf16.msra.mxu0 %v1174
    %1646 = vmatpush.bf16.msra.mxu0 %v1170
    %1647 = vmatpush.bf16.msra.mxu0 %v1166
    %1648 = vmatpush.bf16.msra.mxu0 %v1162
    %1649 = vmatpush.bf16.msra.mxu0 %v1158
    %1650 = vmatpush.bf16.msra.mxu0 %v1154
    %1651 = vmatpush.bf16.msra.mxu0 %v1150
    %1652 = vmatmul.bf16.gmra.mxu0 %v77
    %v1653 = vpop.f32.mrf.mxu0
    %v1654 = vadd.f32 %v1640, %v1653
    %v1655 = vpop.f32.mrf.mxu0
    %v1656 = vadd.f32 %v1642, %v1655
    %1657 = vdwg.mxu0
    %1658 = vmatpush.bf16.msra.mxu0 %v1210
    %1659 = vmatpush.bf16.msra.mxu0 %v1206
    %1660 = vmatpush.bf16.msra.mxu0 %v1202
    %1661 = vmatpush.bf16.msra.mxu0 %v1198
    %1662 = vmatpush.bf16.msra.mxu0 %v1194
    %1663 = vmatpush.bf16.msra.mxu0 %v1190
    %1664 = vmatpush.bf16.msra.mxu0 %v1186
    %1665 = vmatpush.bf16.msra.mxu0 %v1182
    %1666 = vmatmul.bf16.gmra.mxu0 %v78
    %v1667 = vpop.f32.mrf.mxu0
    %v1668 = vadd.f32 %v1654, %v1667
    %v1669 = vpop.f32.mrf.mxu0
    %v1670 = vadd.f32 %v1656, %v1669
    %1671 = vdwg.mxu0
    %1672 = vmatpush.bf16.msra.mxu0 %v1242
    %1673 = vmatpush.bf16.msra.mxu0 %v1238
    %1674 = vmatpush.bf16.msra.mxu0 %v1234
    %1675 = vmatpush.bf16.msra.mxu0 %v1230
    %1676 = vmatpush.bf16.msra.mxu0 %v1226
    %1677 = vmatpush.bf16.msra.mxu0 %v1222
    %1678 = vmatpush.bf16.msra.mxu0 %v1218
    %1679 = vmatpush.bf16.msra.mxu0 %v1214
    %1680 = vmatmul.bf16.gmra.mxu0 %v79
    %v1681 = vpop.f32.mrf.mxu0
    %v1682 = vadd.f32 %v1668, %v1681
    %v1683 = vpop.f32.mrf.mxu0
    %v1684 = vadd.f32 %v1670, %v1683
    %1685 = vdwg.mxu0
    %1686 = vmatpush.bf16.msra.mxu0 %v1274
    %1687 = vmatpush.bf16.msra.mxu0 %v1270
    %1688 = vmatpush.bf16.msra.mxu0 %v1266
    %1689 = vmatpush.bf16.msra.mxu0 %v1262
    %1690 = vmatpush.bf16.msra.mxu0 %v1258
    %1691 = vmatpush.bf16.msra.mxu0 %v1254
    %1692 = vmatpush.bf16.msra.mxu0 %v1250
    %1693 = vmatpush.bf16.msra.mxu0 %v1246
    %1694 = vmatmul.bf16.gmra.mxu0 %v80
    %v1695 = vpop.f32.mrf.mxu0
    %v1696 = vadd.f32 %v1682, %v1695
    %v1697 = vpop.f32.mrf.mxu0
    %v1698 = vadd.f32 %v1684, %v1697
    %1699 = vdwg.mxu0
    %1700 = vmatpush.bf16.msra.mxu0 %v1306
    %1701 = vmatpush.bf16.msra.mxu0 %v1302
    %1702 = vmatpush.bf16.msra.mxu0 %v1298
    %1703 = vmatpush.bf16.msra.mxu0 %v1294
    %1704 = vmatpush.bf16.msra.mxu0 %v1290
    %1705 = vmatpush.bf16.msra.mxu0 %v1286
    %1706 = vmatpush.bf16.msra.mxu0 %v1282
    %1707 = vmatpush.bf16.msra.mxu0 %v1278
    %1708 = vmatmul.bf16.gmra.mxu0 %v81
    %v1709 = vpop.f32.mrf.mxu0
    %v1710 = vadd.f32 %v1696, %v1709
    %v1711 = vpop.f32.mrf.mxu0
    %v1712 = vadd.f32 %v1698, %v1711
    %1713 = vdwg.mxu0
    %1714 = vmatpush.bf16.msra.mxu0 %v1338
    %1715 = vmatpush.bf16.msra.mxu0 %v1334
    %1716 = vmatpush.bf16.msra.mxu0 %v1330
    %1717 = vmatpush.bf16.msra.mxu0 %v1326
    %1718 = vmatpush.bf16.msra.mxu0 %v1322
    %1719 = vmatpush.bf16.msra.mxu0 %v1318
    %1720 = vmatpush.bf16.msra.mxu0 %v1314
    %1721 = vmatpush.bf16.msra.mxu0 %v1310
    %1722 = vmatmul.bf16.gmra.mxu0 %v82
    %v1723 = vpop.f32.mrf.mxu0
    %v1724 = vadd.f32 %v1710, %v1723
    %v1725 = vpop.f32.mrf.mxu0
    %v1726 = vadd.f32 %v1712, %v1725
    %1727 = vdwg.mxu0
    %1728 = vmatpush.bf16.msra.mxu0 %v1370
    %1729 = vmatpush.bf16.msra.mxu0 %v1366
    %1730 = vmatpush.bf16.msra.mxu0 %v1362
    %1731 = vmatpush.bf16.msra.mxu0 %v1358
    %1732 = vmatpush.bf16.msra.mxu0 %v1354
    %1733 = vmatpush.bf16.msra.mxu0 %v1350
    %1734 = vmatpush.bf16.msra.mxu0 %v1346
    %1735 = vmatpush.bf16.msra.mxu0 %v1342
    %1736 = vmatmul.bf16.gmra.mxu0 %v83
    %v1737 = vpop.f32.mrf.mxu0
    %v1738 = vadd.f32 %v1724, %v1737
    %v1739 = vpop.f32.mrf.mxu0
    %v1740 = vadd.f32 %v1726, %v1739
    %1741 = vdwg.mxu0
    %1742 = vmatpush.bf16.msra.mxu0 %v1147
    %1743 = vmatpush.bf16.msra.mxu0 %v1143
    %1744 = vmatpush.bf16.msra.mxu0 %v1139
    %1745 = vmatpush.bf16.msra.mxu0 %v1135
    %1746 = vmatpush.bf16.msra.mxu0 %v1131
    %1747 = vmatpush.bf16.msra.mxu0 %v1127
    %1748 = vmatpush.bf16.msra.mxu0 %v1123
    %1749 = vmatpush.bf16.msra.mxu0 %v1119
    %1750 = vmatmul.bf16.gmra.mxu0 %v76
    %v1751 = vpop.f32.mrf.mxu0
    %v1752 = vadd.f32 %v343, %v1751
    %v1753 = vpop.f32.mrf.mxu0
    %v1754 = vadd.f32 %v343, %v1753
    %1755 = vdwg.mxu0
    %1756 = vmatpush.bf16.msra.mxu0 %v1179
    %1757 = vmatpush.bf16.msra.mxu0 %v1175
    %1758 = vmatpush.bf16.msra.mxu0 %v1171
    %1759 = vmatpush.bf16.msra.mxu0 %v1167
    %1760 = vmatpush.bf16.msra.mxu0 %v1163
    %1761 = vmatpush.bf16.msra.mxu0 %v1159
    %1762 = vmatpush.bf16.msra.mxu0 %v1155
    %1763 = vmatpush.bf16.msra.mxu0 %v1151
    %1764 = vmatmul.bf16.gmra.mxu0 %v77
    %v1765 = vpop.f32.mrf.mxu0
    %v1766 = vadd.f32 %v1752, %v1765
    %v1767 = vpop.f32.mrf.mxu0
    %v1768 = vadd.f32 %v1754, %v1767
    %1769 = vdwg.mxu0
    %1770 = vmatpush.bf16.msra.mxu0 %v1211
    %1771 = vmatpush.bf16.msra.mxu0 %v1207
    %1772 = vmatpush.bf16.msra.mxu0 %v1203
    %1773 = vmatpush.bf16.msra.mxu0 %v1199
    %1774 = vmatpush.bf16.msra.mxu0 %v1195
    %1775 = vmatpush.bf16.msra.mxu0 %v1191
    %1776 = vmatpush.bf16.msra.mxu0 %v1187
    %1777 = vmatpush.bf16.msra.mxu0 %v1183
    %1778 = vmatmul.bf16.gmra.mxu0 %v78
    %v1779 = vpop.f32.mrf.mxu0
    %v1780 = vadd.f32 %v1766, %v1779
    %v1781 = vpop.f32.mrf.mxu0
    %v1782 = vadd.f32 %v1768, %v1781
    %1783 = vdwg.mxu0
    %1784 = vmatpush.bf16.msra.mxu0 %v1243
    %1785 = vmatpush.bf16.msra.mxu0 %v1239
    %1786 = vmatpush.bf16.msra.mxu0 %v1235
    %1787 = vmatpush.bf16.msra.mxu0 %v1231
    %1788 = vmatpush.bf16.msra.mxu0 %v1227
    %1789 = vmatpush.bf16.msra.mxu0 %v1223
    %1790 = vmatpush.bf16.msra.mxu0 %v1219
    %1791 = vmatpush.bf16.msra.mxu0 %v1215
    %1792 = vmatmul.bf16.gmra.mxu0 %v79
    %v1793 = vpop.f32.mrf.mxu0
    %v1794 = vadd.f32 %v1780, %v1793
    %v1795 = vpop.f32.mrf.mxu0
    %v1796 = vadd.f32 %v1782, %v1795
    %1797 = vdwg.mxu0
    %1798 = vmatpush.bf16.msra.mxu0 %v1275
    %1799 = vmatpush.bf16.msra.mxu0 %v1271
    %1800 = vmatpush.bf16.msra.mxu0 %v1267
    %1801 = vmatpush.bf16.msra.mxu0 %v1263
    %1802 = vmatpush.bf16.msra.mxu0 %v1259
    %1803 = vmatpush.bf16.msra.mxu0 %v1255
    %1804 = vmatpush.bf16.msra.mxu0 %v1251
    %1805 = vmatpush.bf16.msra.mxu0 %v1247
    %1806 = vmatmul.bf16.gmra.mxu0 %v80
    %v1807 = vpop.f32.mrf.mxu0
    %v1808 = vadd.f32 %v1794, %v1807
    %v1809 = vpop.f32.mrf.mxu0
    %v1810 = vadd.f32 %v1796, %v1809
    %1811 = vdwg.mxu0
    %1812 = vmatpush.bf16.msra.mxu0 %v1307
    %1813 = vmatpush.bf16.msra.mxu0 %v1303
    %1814 = vmatpush.bf16.msra.mxu0 %v1299
    %1815 = vmatpush.bf16.msra.mxu0 %v1295
    %1816 = vmatpush.bf16.msra.mxu0 %v1291
    %1817 = vmatpush.bf16.msra.mxu0 %v1287
    %1818 = vmatpush.bf16.msra.mxu0 %v1283
    %1819 = vmatpush.bf16.msra.mxu0 %v1279
    %1820 = vmatmul.bf16.gmra.mxu0 %v81
    %v1821 = vpop.f32.mrf.mxu0
    %v1822 = vadd.f32 %v1808, %v1821
    %v1823 = vpop.f32.mrf.mxu0
    %v1824 = vadd.f32 %v1810, %v1823
    %1825 = vdwg.mxu0
    %1826 = vmatpush.bf16.msra.mxu0 %v1339
    %1827 = vmatpush.bf16.msra.mxu0 %v1335
    %1828 = vmatpush.bf16.msra.mxu0 %v1331
    %1829 = vmatpush.bf16.msra.mxu0 %v1327
    %1830 = vmatpush.bf16.msra.mxu0 %v1323
    %1831 = vmatpush.bf16.msra.mxu0 %v1319
    %1832 = vmatpush.bf16.msra.mxu0 %v1315
    %1833 = vmatpush.bf16.msra.mxu0 %v1311
    %1834 = vmatmul.bf16.gmra.mxu0 %v82
    %v1835 = vpop.f32.mrf.mxu0
    %v1836 = vadd.f32 %v1822, %v1835
    %v1837 = vpop.f32.mrf.mxu0
    %v1838 = vadd.f32 %v1824, %v1837
    %1839 = vdwg.mxu0
    %1840 = vmatpush.bf16.msra.mxu0 %v1371
    %1841 = vmatpush.bf16.msra.mxu0 %v1367
    %1842 = vmatpush.bf16.msra.mxu0 %v1363
    %1843 = vmatpush.bf16.msra.mxu0 %v1359
    %1844 = vmatpush.bf16.msra.mxu0 %v1355
    %1845 = vmatpush.bf16.msra.mxu0 %v1351
    %1846 = vmatpush.bf16.msra.mxu0 %v1347
    %1847 = vmatpush.bf16.msra.mxu0 %v1343
    %1848 = vmatmul.bf16.gmra.mxu0 %v83
    %v1849 = vpop.f32.mrf.mxu0
    %v1850 = vadd.f32 %v1836, %v1849
    %v1851 = vpop.f32.mrf.mxu0
    %v1852 = vadd.f32 %v1838, %v1851
    %1853 = vdwg.mxu0
    %1854 = vmatpush.bf16.msra.mxu0 %v1148
    %1855 = vmatpush.bf16.msra.mxu0 %v1144
    %1856 = vmatpush.bf16.msra.mxu0 %v1140
    %1857 = vmatpush.bf16.msra.mxu0 %v1136
    %1858 = vmatpush.bf16.msra.mxu0 %v1132
    %1859 = vmatpush.bf16.msra.mxu0 %v1128
    %1860 = vmatpush.bf16.msra.mxu0 %v1124
    %1861 = vmatpush.bf16.msra.mxu0 %v1120
    %1862 = vmatmul.bf16.gmra.mxu0 %v76
    %v1863 = vpop.f32.mrf.mxu0
    %v1864 = vadd.f32 %v344, %v1863
    %v1865 = vpop.f32.mrf.mxu0
    %v1866 = vadd.f32 %v344, %v1865
    %1867 = vdwg.mxu0
    %1868 = vmatpush.bf16.msra.mxu0 %v1180
    %1869 = vmatpush.bf16.msra.mxu0 %v1176
    %1870 = vmatpush.bf16.msra.mxu0 %v1172
    %1871 = vmatpush.bf16.msra.mxu0 %v1168
    %1872 = vmatpush.bf16.msra.mxu0 %v1164
    %1873 = vmatpush.bf16.msra.mxu0 %v1160
    %1874 = vmatpush.bf16.msra.mxu0 %v1156
    %1875 = vmatpush.bf16.msra.mxu0 %v1152
    %1876 = vmatmul.bf16.gmra.mxu0 %v77
    %v1877 = vpop.f32.mrf.mxu0
    %v1878 = vadd.f32 %v1864, %v1877
    %v1879 = vpop.f32.mrf.mxu0
    %v1880 = vadd.f32 %v1866, %v1879
    %1881 = vdwg.mxu0
    %1882 = vmatpush.bf16.msra.mxu0 %v1212
    %1883 = vmatpush.bf16.msra.mxu0 %v1208
    %1884 = vmatpush.bf16.msra.mxu0 %v1204
    %1885 = vmatpush.bf16.msra.mxu0 %v1200
    %1886 = vmatpush.bf16.msra.mxu0 %v1196
    %1887 = vmatpush.bf16.msra.mxu0 %v1192
    %1888 = vmatpush.bf16.msra.mxu0 %v1188
    %1889 = vmatpush.bf16.msra.mxu0 %v1184
    %1890 = vmatmul.bf16.gmra.mxu0 %v78
    %v1891 = vpop.f32.mrf.mxu0
    %v1892 = vadd.f32 %v1878, %v1891
    %v1893 = vpop.f32.mrf.mxu0
    %v1894 = vadd.f32 %v1880, %v1893
    %1895 = vdwg.mxu0
    %1896 = vmatpush.bf16.msra.mxu0 %v1244
    %1897 = vmatpush.bf16.msra.mxu0 %v1240
    %1898 = vmatpush.bf16.msra.mxu0 %v1236
    %1899 = vmatpush.bf16.msra.mxu0 %v1232
    %1900 = vmatpush.bf16.msra.mxu0 %v1228
    %1901 = vmatpush.bf16.msra.mxu0 %v1224
    %1902 = vmatpush.bf16.msra.mxu0 %v1220
    %1903 = vmatpush.bf16.msra.mxu0 %v1216
    %1904 = vmatmul.bf16.gmra.mxu0 %v79
    %v1905 = vpop.f32.mrf.mxu0
    %v1906 = vadd.f32 %v1892, %v1905
    %v1907 = vpop.f32.mrf.mxu0
    %v1908 = vadd.f32 %v1894, %v1907
    %1909 = vdwg.mxu0
    %1910 = vmatpush.bf16.msra.mxu0 %v1276
    %1911 = vmatpush.bf16.msra.mxu0 %v1272
    %1912 = vmatpush.bf16.msra.mxu0 %v1268
    %1913 = vmatpush.bf16.msra.mxu0 %v1264
    %1914 = vmatpush.bf16.msra.mxu0 %v1260
    %1915 = vmatpush.bf16.msra.mxu0 %v1256
    %1916 = vmatpush.bf16.msra.mxu0 %v1252
    %1917 = vmatpush.bf16.msra.mxu0 %v1248
    %1918 = vmatmul.bf16.gmra.mxu0 %v80
    %v1919 = vpop.f32.mrf.mxu0
    %v1920 = vadd.f32 %v1906, %v1919
    %v1921 = vpop.f32.mrf.mxu0
    %v1922 = vadd.f32 %v1908, %v1921
    %1923 = vdwg.mxu0
    %1924 = vmatpush.bf16.msra.mxu0 %v1308
    %1925 = vmatpush.bf16.msra.mxu0 %v1304
    %1926 = vmatpush.bf16.msra.mxu0 %v1300
    %1927 = vmatpush.bf16.msra.mxu0 %v1296
    %1928 = vmatpush.bf16.msra.mxu0 %v1292
    %1929 = vmatpush.bf16.msra.mxu0 %v1288
    %1930 = vmatpush.bf16.msra.mxu0 %v1284
    %1931 = vmatpush.bf16.msra.mxu0 %v1280
    %1932 = vmatmul.bf16.gmra.mxu0 %v81
    %v1933 = vpop.f32.mrf.mxu0
    %v1934 = vadd.f32 %v1920, %v1933
    %v1935 = vpop.f32.mrf.mxu0
    %v1936 = vadd.f32 %v1922, %v1935
    %1937 = vdwg.mxu0
    %1938 = vmatpush.bf16.msra.mxu0 %v1340
    %1939 = vmatpush.bf16.msra.mxu0 %v1336
    %1940 = vmatpush.bf16.msra.mxu0 %v1332
    %1941 = vmatpush.bf16.msra.mxu0 %v1328
    %1942 = vmatpush.bf16.msra.mxu0 %v1324
    %1943 = vmatpush.bf16.msra.mxu0 %v1320
    %1944 = vmatpush.bf16.msra.mxu0 %v1316
    %1945 = vmatpush.bf16.msra.mxu0 %v1312
    %1946 = vmatmul.bf16.gmra.mxu0 %v82
    %v1947 = vpop.f32.mrf.mxu0
    %v1948 = vadd.f32 %v1934, %v1947
    %v1949 = vpop.f32.mrf.mxu0
    %v1950 = vadd.f32 %v1936, %v1949
    %1951 = vdwg.mxu0
    %1952 = vmatpush.bf16.msra.mxu0 %v1372
    %1953 = vmatpush.bf16.msra.mxu0 %v1368
    %1954 = vmatpush.bf16.msra.mxu0 %v1364
    %1955 = vmatpush.bf16.msra.mxu0 %v1360
    %1956 = vmatpush.bf16.msra.mxu0 %v1356
    %1957 = vmatpush.bf16.msra.mxu0 %v1352
    %1958 = vmatpush.bf16.msra.mxu0 %v1348
    %1959 = vmatpush.bf16.msra.mxu0 %v1344
    %1960 = vmatmul.bf16.gmra.mxu0 %v83
    %v1961 = vpop.f32.mrf.mxu0
    %v1962 = vadd.f32 %v1948, %v1961
    %v1963 = vpop.f32.mrf.mxu0
    %v1964 = vadd.f32 %v1950, %v1963
    %1965 = vdwg.mxu0
    %1966 = vmatpush.bf16.msra.mxu0 %v1149
    %1967 = vmatpush.bf16.msra.mxu0 %v1145
    %1968 = vmatpush.bf16.msra.mxu0 %v1141
    %1969 = vmatpush.bf16.msra.mxu0 %v1137
    %1970 = vmatpush.bf16.msra.mxu0 %v1133
    %1971 = vmatpush.bf16.msra.mxu0 %v1129
    %1972 = vmatpush.bf16.msra.mxu0 %v1125
    %1973 = vmatpush.bf16.msra.mxu0 %v1121
    %1974 = vmatmul.bf16.gmra.mxu0 %v76
    %v1975 = vpop.f32.mrf.mxu0
    %v1976 = vadd.f32 %v345, %v1975
    %v1977 = vpop.f32.mrf.mxu0
    %v1978 = vadd.f32 %v345, %v1977
    %1979 = vdwg.mxu0
    %1980 = vmatpush.bf16.msra.mxu0 %v1181
    %1981 = vmatpush.bf16.msra.mxu0 %v1177
    %1982 = vmatpush.bf16.msra.mxu0 %v1173
    %1983 = vmatpush.bf16.msra.mxu0 %v1169
    %1984 = vmatpush.bf16.msra.mxu0 %v1165
    %1985 = vmatpush.bf16.msra.mxu0 %v1161
    %1986 = vmatpush.bf16.msra.mxu0 %v1157
    %1987 = vmatpush.bf16.msra.mxu0 %v1153
    %1988 = vmatmul.bf16.gmra.mxu0 %v77
    %v1989 = vpop.f32.mrf.mxu0
    %v1990 = vadd.f32 %v1976, %v1989
    %v1991 = vpop.f32.mrf.mxu0
    %v1992 = vadd.f32 %v1978, %v1991
    %1993 = vdwg.mxu0
    %1994 = vmatpush.bf16.msra.mxu0 %v1213
    %1995 = vmatpush.bf16.msra.mxu0 %v1209
    %1996 = vmatpush.bf16.msra.mxu0 %v1205
    %1997 = vmatpush.bf16.msra.mxu0 %v1201
    %1998 = vmatpush.bf16.msra.mxu0 %v1197
    %1999 = vmatpush.bf16.msra.mxu0 %v1193
    %2000 = vmatpush.bf16.msra.mxu0 %v1189
    %2001 = vmatpush.bf16.msra.mxu0 %v1185
    %2002 = vmatmul.bf16.gmra.mxu0 %v78
    %v2003 = vpop.f32.mrf.mxu0
    %v2004 = vadd.f32 %v1990, %v2003
    %v2005 = vpop.f32.mrf.mxu0
    %v2006 = vadd.f32 %v1992, %v2005
    %2007 = vdwg.mxu0
    %2008 = vmatpush.bf16.msra.mxu0 %v1245
    %2009 = vmatpush.bf16.msra.mxu0 %v1241
    %2010 = vmatpush.bf16.msra.mxu0 %v1237
    %2011 = vmatpush.bf16.msra.mxu0 %v1233
    %2012 = vmatpush.bf16.msra.mxu0 %v1229
    %2013 = vmatpush.bf16.msra.mxu0 %v1225
    %2014 = vmatpush.bf16.msra.mxu0 %v1221
    %2015 = vmatpush.bf16.msra.mxu0 %v1217
    %2016 = vmatmul.bf16.gmra.mxu0 %v79
    %v2017 = vpop.f32.mrf.mxu0
    %v2018 = vadd.f32 %v2004, %v2017
    %v2019 = vpop.f32.mrf.mxu0
    %v2020 = vadd.f32 %v2006, %v2019
    %2021 = vdwg.mxu0
    %2022 = vmatpush.bf16.msra.mxu0 %v1277
    %2023 = vmatpush.bf16.msra.mxu0 %v1273
    %2024 = vmatpush.bf16.msra.mxu0 %v1269
    %2025 = vmatpush.bf16.msra.mxu0 %v1265
    %2026 = vmatpush.bf16.msra.mxu0 %v1261
    %2027 = vmatpush.bf16.msra.mxu0 %v1257
    %2028 = vmatpush.bf16.msra.mxu0 %v1253
    %2029 = vmatpush.bf16.msra.mxu0 %v1249
    %2030 = vmatmul.bf16.gmra.mxu0 %v80
    %v2031 = vpop.f32.mrf.mxu0
    %v2032 = vadd.f32 %v2018, %v2031
    %v2033 = vpop.f32.mrf.mxu0
    %v2034 = vadd.f32 %v2020, %v2033
    %2035 = vdwg.mxu0
    %2036 = vmatpush.bf16.msra.mxu0 %v1309
    %2037 = vmatpush.bf16.msra.mxu0 %v1305
    %2038 = vmatpush.bf16.msra.mxu0 %v1301
    %2039 = vmatpush.bf16.msra.mxu0 %v1297
    %2040 = vmatpush.bf16.msra.mxu0 %v1293
    %2041 = vmatpush.bf16.msra.mxu0 %v1289
    %2042 = vmatpush.bf16.msra.mxu0 %v1285
    %2043 = vmatpush.bf16.msra.mxu0 %v1281
    %2044 = vmatmul.bf16.gmra.mxu0 %v81
    %v2045 = vpop.f32.mrf.mxu0
    %v2046 = vadd.f32 %v2032, %v2045
    %v2047 = vpop.f32.mrf.mxu0
    %v2048 = vadd.f32 %v2034, %v2047
    %2049 = vdwg.mxu0
    %2050 = vmatpush.bf16.msra.mxu0 %v1341
    %2051 = vmatpush.bf16.msra.mxu0 %v1337
    %2052 = vmatpush.bf16.msra.mxu0 %v1333
    %2053 = vmatpush.bf16.msra.mxu0 %v1329
    %2054 = vmatpush.bf16.msra.mxu0 %v1325
    %2055 = vmatpush.bf16.msra.mxu0 %v1321
    %2056 = vmatpush.bf16.msra.mxu0 %v1317
    %2057 = vmatpush.bf16.msra.mxu0 %v1313
    %2058 = vmatmul.bf16.gmra.mxu0 %v82
    %v2059 = vpop.f32.mrf.mxu0
    %v2060 = vadd.f32 %v2046, %v2059
    %v2061 = vpop.f32.mrf.mxu0
    %v2062 = vadd.f32 %v2048, %v2061
    %2063 = vdwg.mxu0
    %2064 = vmatpush.bf16.msra.mxu0 %v1373
    %2065 = vmatpush.bf16.msra.mxu0 %v1369
    %2066 = vmatpush.bf16.msra.mxu0 %v1365
    %2067 = vmatpush.bf16.msra.mxu0 %v1361
    %2068 = vmatpush.bf16.msra.mxu0 %v1357
    %2069 = vmatpush.bf16.msra.mxu0 %v1353
    %2070 = vmatpush.bf16.msra.mxu0 %v1349
    %2071 = vmatpush.bf16.msra.mxu0 %v1345
    %2072 = vmatmul.bf16.gmra.mxu0 %v83
    %v2073 = vpop.f32.mrf.mxu0
    %v2074 = vadd.f32 %v2060, %v2073
    %v2075 = vpop.f32.mrf.mxu0
    %v2076 = vadd.f32 %v2062, %v2075
    %2077 = vdwg.mxu0
    %v2078 = vmax.f32 %v1738, 0.0
    %v2079 = vmax.f32 %v1850, 0.0
    %v2080 = vmax.f32 %v1962, 0.0
    %v2081 = vmax.f32 %v2074, 0.0
    %v2082 = vmax.f32 %v1740, 0.0
    %v2083 = vmax.f32 %v1852, 0.0
    %v2084 = vmax.f32 %v1964, 0.0
    %v2085 = vmax.f32 %v2076, 0.0
    %2086 = vst [vmem:[#allocation8] sm:$0xff] %v2078
    %2087 = vst [vmem:[#allocation8 + $0x8] sm:$0xff] %v2079
    %2088 = vst [vmem:[#allocation8 + $0x10] sm:$0xff] %v2080
    %2089 = vst [vmem:[#allocation8 + $0x18] sm:$0xff] %v2081
    %2090 = vst [vmem:[#allocation8 + $0x20] sm:$0xff] %v2082
    %2091 = vst [vmem:[#allocation8 + $0x28] sm:$0xff] %v2083
    %2092 = vst [vmem:[#allocation8 + $0x30] sm:$0xff] %v2084
    %2093 = vst [vmem:[#allocation8 + $0x38] sm:$0xff] %v2085
    // Predicated region
    $region26: #{tpu_custom_call.1} parent=1 // pred_check
      _
    $region27: #{tpu_custom_call.1} parent=1 // pred_check_branch
      %2095 = sbr.rel (0) target = $region29
    $region28: #{tpu_custom_call.1} parent=1 // pred_region
      %2097 = vsyncadd [#allocation4], 0
      %s2098 = sshll.u32 [#allocation8], 4
      %s2099 = int_to_ptr.vmem [resolvable:$true] %s2098
      %s2100 = sshll.u32 %s3, 4
      %s2101 = int_to_ptr.hbm [resolvable:$true] %s2100
      %2106 = dma.vmem_to_hbm [thread:$0]  %s2099, 1024, %s2101, [#allocation4], 512, 512, 32
    $region29: #{tpu_custom_call.1} parent=1 // pred_fallthru
      _
    // Predicated region
    $region30: #{tpu_custom_call.1} parent=1 // pred_check
      _
    $region31: #{tpu_custom_call.1} parent=1 // pred_check_branch
      %2108 = sbr.rel (0) target = $region33
    $region32: #{tpu_custom_call.1} parent=1 // pred_region
      %2110 = dma.done [#allocation4], 1024
    $region33: #{tpu_custom_call.1} parent=1 // pred_fallthru
      _
    %2111 = vsyncpa [#allocation3], 1
    %2112 = vsyncpa [#allocation6], 1
    %2113 = vsyncpa [#allocation4], 1

</llo_original>
